<compile_context>
chip_gen: v6e
topology: v6e:2x2x1
jax: 0.10.0
libtpu: 0.0.40
codegen_flags: <defaults>
</compile_context>

<pallas_src>
import jax
import jax.numpy as jnp
from jax.experimental import pallas as pl
from jax.experimental.pallas import tpu as pltpu


def critic_forward(node, edge, node_adj, edge_adj, D_v, D_e, T, p):
    f32 = jnp.float32
    B, N, node_in = node.shape
    _, E, edge_in = edge.shape
    node_out = p["wv1"].shape[1]
    edge_out = p["we1"].shape[1]

    # ---- batch-invariant precompute, hoisted out of the kernel (runs once) ----
    A_v = (D_v @ node_adj @ D_v).astype(f32)                 # (N, N)
    A_e = (D_e @ edge_adj @ D_e).astype(f32)                 # (E, E)
    T_f = T.astype(f32)                                      # (N, E)
    T_t = T_f.T                                              # (E, N), pre-transposed
    # block-averaging matrix: v_mean = mean_mat @ v  (per-graph mean over nodes)
    mean_mat = jnp.kron(jnp.eye(B, dtype=f32), jnp.ones((1, N), f32) / N)  # (B, B*N)

    node_flat = node.reshape(B * N, node_in).astype(f32)     # (B*N, Fn)
    edge_flat = edge.reshape(B * E, edge_in).astype(f32)     # (B*E, Fe)

    # pack all tiny vectors (gates / biases / head projection) into one slab
    W = max(edge_in, edge_out, node_out, 1)

    def row(v):
        v = v.reshape(-1).astype(f32)
        return jnp.pad(v, (0, W - v.shape[0]))

    vec_slab = jnp.stack([
        row(p["pe1"]), row(p["bv1"]), row(p["pv1"]), row(p["be1"]),
        row(p["pe2"]), row(p["bv2"]), row(p["pv2"]), row(p["be2"]),
        row(p["bp1"]), row(p["wp2"]), row(p["bp2"]),
    ], axis=0)                                               # (11, W)

    def kernel(node_ref, edge_ref, av_ref, ae_ref, t_ref, tt_ref,
               wv1_ref, we1_ref, wv2_ref, we2_ref, wp1_ref,
               vec_ref, mean_ref, value_ref):
        nf = node_ref[...]                                   # (B*N, Fn)
        ef = edge_ref[...]                                   # (B*E, Fe)
        Av = av_ref[...]                                     # (N, N)
        Ae = ae_ref[...]                                     # (E, E)
        Tm = t_ref[...]                                      # (N, E)
        Tt = tt_ref[...]                                     # (E, N)
        vecs = vec_ref[...]                                  # (11, W)

        pe1 = vecs[0:1, :edge_in]
        bv1 = vecs[1:2, :node_out]
        pv1 = vecs[2:3, :node_out]
        be1 = vecs[3:4, :edge_out]
        pe2 = vecs[4:5, :edge_out]
        bv2 = vecs[5:6, :node_out]
        pv2 = vecs[6:7, :node_out]
        be2 = vecs[7:8, :edge_out]
        bp1 = vecs[8:9, :node_out]
        wp2 = vecs[9:10, :node_out]
        bp2 = vecs[10:11, 0:1]

        def layer(nf, ef, Wv, bv, pe, We, be, pv):
            # node update: edge gate via VPU mul + lane reduce (no 1-wide matmul)
            gate_e = jnp.sum(ef * pe, axis=-1, keepdims=True)          # (B*E, 1)
            aggs = []
            for b in range(B):                                         # tiny static loop
                ge = gate_e[b * E:(b + 1) * E]                         # (E, 1)
                M_v = jnp.dot(Tm, ge * Tt,
                              preferred_element_type=jnp.float32)      # (N, N)
                aggs.append(jnp.dot(M_v * Av, nf[b * N:(b + 1) * N],
                                    preferred_element_type=jnp.float32))
            agg_v = jnp.concatenate(aggs, axis=0)                      # (B*N, Fn)
            nf_new = jax.nn.relu(
                jnp.dot(agg_v, Wv, preferred_element_type=jnp.float32) + bv)

            # edge update (uses updated node features)
            gate_v = jnp.sum(nf_new * pv, axis=-1, keepdims=True)      # (B*N, 1)
            aggs = []
            for b in range(B):
                gv = gate_v[b * N:(b + 1) * N]                         # (N, 1)
                M_e = jnp.dot(Tt, gv * Tm,
                              preferred_element_type=jnp.float32)      # (E, E)
                aggs.append(jnp.dot(M_e * Ae, ef[b * E:(b + 1) * E],
                                    preferred_element_type=jnp.float32))
            agg_e = jnp.concatenate(aggs, axis=0)                      # (B*E, Fe)
            ef_new = jax.nn.relu(
                jnp.dot(agg_e, We, preferred_element_type=jnp.float32) + be)
            return nf_new, ef_new

        nf, ef = layer(nf, ef, wv1_ref[...], bv1, pe1, we1_ref[...], be1, pv1)
        nf, ef = layer(nf, ef, wv2_ref[...], bv2, pe2, we2_ref[...], be2, pv2)

        # critic head: relu(Linear) -> per-graph mean over nodes -> Linear(., 1)
        v = jax.nn.relu(
            jnp.dot(nf, wp1_ref[...], preferred_element_type=jnp.float32) + bp1)
        v_mean = jnp.dot(mean_ref[...], v,
                         preferred_element_type=jnp.float32)           # (B, Fo)
        # final 1-wide projection done on the VPU (mul + lane reduce)
        value_ref[...] = jnp.sum(v_mean * wp2, axis=-1, keepdims=True) + bp2  # (B, 1)

    vmem_spec = pl.BlockSpec(memory_space=pltpu.MemorySpace.VMEM)
    inputs = [node_flat, edge_flat, A_v, A_e, T_f, T_t,
              p["wv1"], p["we1"], p["wv2"], p["we2"], p["wp1"],
              vec_slab, mean_mat]

    out = pl.pallas_call(
        kernel,
        out_shape=jax.ShapeDtypeStruct((B, 1), f32),
        in_specs=[vmem_spec] * len(inputs),
        out_specs=vmem_spec,
    )(*inputs)
    return out


def reference_forward(node, edge, node_adj, edge_adj, D_v, D_e, T, p):
    """Plain-JAX reference mirroring the kernel math."""
    A_v = D_v @ node_adj @ D_v
    A_e = D_e @ edge_adj @ D_e

    def layer(n, e, Wv, bv, pe, We, be, pv):
        gate_e = e @ pe
        M_v = T @ (gate_e * T.T)
        n2 = jax.nn.relu((M_v * A_v) @ n @ Wv + bv)
        gate_v = n2 @ pv
        M_e = T.T @ (gate_v * T)
        e2 = jax.nn.relu((M_e * A_e) @ e @ We + be)
        return n2, e2

    outs = []
    for b in range(node.shape[0]):
        n, e = layer(node[b], edge[b], p["wv1"], p["bv1"], p["pe1"],
                     p["we1"], p["be1"], p["pv1"])
        n, e = layer(n, e, p["wv2"], p["bv2"], p["pe2"],
                     p["we2"], p["be2"], p["pv2"])
        v = jax.nn.relu(n @ p["wp1"] + p["bp1"])
        v = jnp.mean(v, axis=0, keepdims=True)
        outs.append(v @ p["wp2"] + p["bp2"])
    return jnp.concatenate(outs, axis=0)


if __name__ == "__main__":
    key = jax.random.PRNGKey(0)
    B, N, E = 2, 16, 24
    node_in, edge_in, node_out, edge_out = 8, 6, 16, 16

    ks = jax.random.split(key, 32)
    f32 = jnp.float32

    # graph data
    node = jax.random.normal(ks[0], (B, N, node_in), dtype=f32)
    edge = jax.random.normal(ks[1], (B, E, edge_in), dtype=f32)
    A_v_raw = (jax.random.uniform(ks[2], (N, N)) > 0.6).astype(f32)
    node_adj = jnp.clip(A_v_raw + A_v_raw.T, 0.0, 1.0) + jnp.eye(N, dtype=f32)
    A_e_raw = (jax.random.uniform(ks[3], (E, E)) > 0.6).astype(f32)
    edge_adj = jnp.clip(A_e_raw + A_e_raw.T, 0.0, 1.0) + jnp.eye(E, dtype=f32)
    T = (jax.random.uniform(ks[4], (N, E)) > 0.7).astype(f32)
    D_v = jnp.diag(1.0 / jnp.sqrt(node_adj.sum(-1)))
    D_e = jnp.diag(1.0 / jnp.sqrt(edge_adj.sum(-1)))

    def init_w(k, shape, scale=0.1):
        return (scale * jax.random.normal(k, shape)).astype(f32)

    params = {
        # GCN1
        "wv1": init_w(ks[5], (node_in, node_out)),
        "bv1": init_w(ks[6], (1, node_out)),
        "pe1": init_w(ks[7], (edge_in, 1)),
        "we1": init_w(ks[8], (edge_in, edge_out)),
        "be1": init_w(ks[9], (1, edge_out)),
        "pv1": init_w(ks[10], (node_out, 1)),
        # GCN2
        "wv2": init_w(ks[11], (node_out, node_out)),
        "bv2": init_w(ks[12], (1, node_out)),
        "pe2": init_w(ks[13], (edge_out, 1)),
        "we2": init_w(ks[14], (edge_out, edge_out)),
        "be2": init_w(ks[15], (1, edge_out)),
        "pv2": init_w(ks[16], (node_out, 1)),
        # critic head
        "wp1": init_w(ks[17], (node_out, node_out)),
        "bp1": init_w(ks[18], (1, node_out)),
        "wp2": init_w(ks[19], (node_out, 1)),
        "bp2": init_w(ks[20], (1, 1)),
    }

    value = critic_forward(node, edge, node_adj, edge_adj, D_v, D_e, T, params)
    value = jax.block_until_ready(value)

    ref = reference_forward(node, edge, node_adj, edge_adj, D_v, D_e, T, params)
    assert value.shape == (B, 1), value.shape
    assert jnp.allclose(value, ref, rtol=1e-4, atol=1e-4), (value, ref)

    print("KERNEL_OK")
</pallas_src>

<mosaic_0001>
module attributes {stable_mosaic.version = 11 : i64} {
  func.func @kernel(%arg0: memref<32x8xf32, #tpu.memory_space<vmem>>, %arg1: memref<48x6xf32, #tpu.memory_space<vmem>>, %arg2: memref<16x16xf32, #tpu.memory_space<vmem>>, %arg3: memref<24x24xf32, #tpu.memory_space<vmem>>, %arg4: memref<16x24xf32, #tpu.memory_space<vmem>>, %arg5: memref<24x16xf32, #tpu.memory_space<vmem>>, %arg6: memref<8x16xf32, #tpu.memory_space<vmem>>, %arg7: memref<6x16xf32, #tpu.memory_space<vmem>>, %arg8: memref<16x16xf32, #tpu.memory_space<vmem>>, %arg9: memref<16x16xf32, #tpu.memory_space<vmem>>, %arg10: memref<16x16xf32, #tpu.memory_space<vmem>>, %arg11: memref<11x16xf32, #tpu.memory_space<vmem>>, %arg12: memref<2x32xf32, #tpu.memory_space<vmem>>, %arg13: memref<2x1xf32, #tpu.memory_space<vmem>>) attributes {dimension_semantics = [], scalar_prefetch = 0 : i64, scratch_operands = 0 : i64, tpu.core_type = #tpu.core_type<tc>} {
    %c0 = arith.constant 0 : index
    %c0_0 = arith.constant 0 : index
    %0 = vector.load %arg0[%c0, %c0_0] : memref<32x8xf32, #tpu.memory_space<vmem>>, vector<32x8xf32>
    %c0_1 = arith.constant 0 : index
    %c0_2 = arith.constant 0 : index
    %1 = vector.load %arg1[%c0_1, %c0_2] : memref<48x6xf32, #tpu.memory_space<vmem>>, vector<48x6xf32>
    %c0_3 = arith.constant 0 : index
    %c0_4 = arith.constant 0 : index
    %2 = vector.load %arg2[%c0_3, %c0_4] : memref<16x16xf32, #tpu.memory_space<vmem>>, vector<16x16xf32>
    %c0_5 = arith.constant 0 : index
    %c0_6 = arith.constant 0 : index
    %3 = vector.load %arg3[%c0_5, %c0_6] : memref<24x24xf32, #tpu.memory_space<vmem>>, vector<24x24xf32>
    %c0_7 = arith.constant 0 : index
    %c0_8 = arith.constant 0 : index
    %4 = vector.load %arg4[%c0_7, %c0_8] : memref<16x24xf32, #tpu.memory_space<vmem>>, vector<16x24xf32>
    %c0_9 = arith.constant 0 : index
    %c0_10 = arith.constant 0 : index
    %5 = vector.load %arg5[%c0_9, %c0_10] : memref<24x16xf32, #tpu.memory_space<vmem>>, vector<24x16xf32>
    %c0_11 = arith.constant 0 : index
    %c0_12 = arith.constant 0 : index
    %6 = vector.load %arg11[%c0_11, %c0_12] : memref<11x16xf32, #tpu.memory_space<vmem>>, vector<11x16xf32>
    %7 = vector.extract_strided_slice %6 {offsets = [0, 0], sizes = [1, 6], strides = [1, 1]} : vector<11x16xf32> to vector<1x6xf32>
    %8 = vector.extract_strided_slice %6 {offsets = [1, 0], sizes = [1, 16], strides = [1, 1]} : vector<11x16xf32> to vector<1x16xf32>
    %9 = vector.extract_strided_slice %6 {offsets = [2, 0], sizes = [1, 16], strides = [1, 1]} : vector<11x16xf32> to vector<1x16xf32>
    %10 = vector.extract_strided_slice %6 {offsets = [3, 0], sizes = [1, 16], strides = [1, 1]} : vector<11x16xf32> to vector<1x16xf32>
    %11 = vector.extract_strided_slice %6 {offsets = [4, 0], sizes = [1, 16], strides = [1, 1]} : vector<11x16xf32> to vector<1x16xf32>
    %12 = vector.extract_strided_slice %6 {offsets = [5, 0], sizes = [1, 16], strides = [1, 1]} : vector<11x16xf32> to vector<1x16xf32>
    %13 = vector.extract_strided_slice %6 {offsets = [8, 0], sizes = [1, 16], strides = [1, 1]} : vector<11x16xf32> to vector<1x16xf32>
    %14 = vector.extract_strided_slice %6 {offsets = [9, 0], sizes = [1, 16], strides = [1, 1]} : vector<11x16xf32> to vector<1x16xf32>
    %15 = vector.extract_strided_slice %6 {offsets = [10, 0], sizes = [1, 1], strides = [1, 1]} : vector<11x16xf32> to vector<1x1xf32>
    %c0_13 = arith.constant 0 : index
    %c0_14 = arith.constant 0 : index
    %16 = vector.load %arg6[%c0_13, %c0_14] : memref<8x16xf32, #tpu.memory_space<vmem>>, vector<8x16xf32>
    %c0_15 = arith.constant 0 : index
    %c0_16 = arith.constant 0 : index
    %17 = vector.load %arg7[%c0_15, %c0_16] : memref<6x16xf32, #tpu.memory_space<vmem>>, vector<6x16xf32>
    %18 = vector.broadcast %7 : vector<1x6xf32> to vector<48x6xf32>
    %19 = arith.mulf %1, %18 : vector<48x6xf32>
    %cst = arith.constant dense<0.000000e+00> : vector<48xf32>
    %20 = vector.multi_reduction <add>, %19, %cst [1] : vector<48x6xf32> to vector<48xf32>
    %21 = vector.shape_cast %20 : vector<48xf32> to vector<48x1xf32>
    %22 = vector.extract_strided_slice %21 {offsets = [0, 0], sizes = [24, 1], strides = [1, 1]} : vector<48x1xf32> to vector<24x1xf32>
    %23 = vector.broadcast %22 : vector<24x1xf32> to vector<24x16xf32>
    %24 = arith.mulf %23, %5 : vector<24x16xf32>
    %cst_17 = arith.constant dense<0.000000e+00> : vector<16x16xf32>
    %25 = tpu.matmul %4, %24, %cst_17 {dimension_numbers = #tpu.dot_dimension_numbers<[1], [0], [0], [1], [0, 0, 1, 1], [], []>} : vector<16x24xf32>, vector<24x16xf32>, vector<16x16xf32> -> vector<16x16xf32>
    %26 = arith.mulf %25, %2 : vector<16x16xf32>
    %27 = vector.extract_strided_slice %0 {offsets = [0, 0], sizes = [16, 8], strides = [1, 1]} : vector<32x8xf32> to vector<16x8xf32>
    %cst_18 = arith.constant dense<0.000000e+00> : vector<16x8xf32>
    %28 = tpu.matmul %26, %27, %cst_18 {dimension_numbers = #tpu.dot_dimension_numbers<[1], [0], [0], [1], [0, 0, 1, 1], [], []>} : vector<16x16xf32>, vector<16x8xf32>, vector<16x8xf32> -> vector<16x8xf32>
    %29 = vector.extract_strided_slice %21 {offsets = [24, 0], sizes = [24, 1], strides = [1, 1]} : vector<48x1xf32> to vector<24x1xf32>
    %30 = vector.broadcast %29 : vector<24x1xf32> to vector<24x16xf32>
    %31 = arith.mulf %30, %5 : vector<24x16xf32>
    %cst_19 = arith.constant dense<0.000000e+00> : vector<16x16xf32>
    %32 = tpu.matmul %4, %31, %cst_19 {dimension_numbers = #tpu.dot_dimension_numbers<[1], [0], [0], [1], [0, 0, 1, 1], [], []>} : vector<16x24xf32>, vector<24x16xf32>, vector<16x16xf32> -> vector<16x16xf32>
    %33 = arith.mulf %32, %2 : vector<16x16xf32>
    %34 = vector.extract_strided_slice %0 {offsets = [16, 0], sizes = [16, 8], strides = [1, 1]} : vector<32x8xf32> to vector<16x8xf32>
    %cst_20 = arith.constant dense<0.000000e+00> : vector<16x8xf32>
    %35 = tpu.matmul %33, %34, %cst_20 {dimension_numbers = #tpu.dot_dimension_numbers<[1], [0], [0], [1], [0, 0, 1, 1], [], []>} : vector<16x16xf32>, vector<16x8xf32>, vector<16x8xf32> -> vector<16x8xf32>
    %36 = tpu.concatenate %28, %35 in 0 : vector<16x8xf32>, vector<16x8xf32> -> vector<32x8xf32>
    %cst_21 = arith.constant dense<0.000000e+00> : vector<32x16xf32>
    %37 = tpu.matmul %36, %16, %cst_21 {dimension_numbers = #tpu.dot_dimension_numbers<[1], [0], [0], [1], [0, 0, 1, 1], [], []>} : vector<32x8xf32>, vector<8x16xf32>, vector<32x16xf32> -> vector<32x16xf32>
    %38 = vector.broadcast %8 : vector<1x16xf32> to vector<32x16xf32>
    %39 = arith.addf %37, %38 : vector<32x16xf32>
    %cst_22 = arith.constant 0.000000e+00 : f32
    %40 = vector.broadcast %cst_22 : f32 to vector<32x16xf32>
    %41 = arith.maximumf %39, %40 : vector<32x16xf32>
    %42 = vector.broadcast %9 : vector<1x16xf32> to vector<32x16xf32>
    %43 = arith.mulf %41, %42 : vector<32x16xf32>
    %cst_23 = arith.constant dense<0.000000e+00> : vector<32xf32>
    %44 = vector.multi_reduction <add>, %43, %cst_23 [1] : vector<32x16xf32> to vector<32xf32>
    %45 = vector.shape_cast %44 : vector<32xf32> to vector<32x1xf32>
    %46 = vector.extract_strided_slice %45 {offsets = [0, 0], sizes = [16, 1], strides = [1, 1]} : vector<32x1xf32> to vector<16x1xf32>
    %47 = vector.broadcast %46 : vector<16x1xf32> to vector<16x24xf32>
    %48 = arith.mulf %47, %4 : vector<16x24xf32>
    %cst_24 = arith.constant dense<0.000000e+00> : vector<24x24xf32>
    %49 = tpu.matmul %5, %48, %cst_24 {dimension_numbers = #tpu.dot_dimension_numbers<[1], [0], [0], [1], [0, 0, 1, 1], [], []>} : vector<24x16xf32>, vector<16x24xf32>, vector<24x24xf32> -> vector<24x24xf32>
    %50 = arith.mulf %49, %3 : vector<24x24xf32>
    %51 = vector.extract_strided_slice %1 {offsets = [0, 0], sizes = [24, 6], strides = [1, 1]} : vector<48x6xf32> to vector<24x6xf32>
    %cst_25 = arith.constant dense<0.000000e+00> : vector<24x6xf32>
    %52 = tpu.matmul %50, %51, %cst_25 {dimension_numbers = #tpu.dot_dimension_numbers<[1], [0], [0], [1], [0, 0, 1, 1], [], []>} : vector<24x24xf32>, vector<24x6xf32>, vector<24x6xf32> -> vector<24x6xf32>
    %53 = vector.extract_strided_slice %45 {offsets = [16, 0], sizes = [16, 1], strides = [1, 1]} : vector<32x1xf32> to vector<16x1xf32>
    %54 = vector.broadcast %53 : vector<16x1xf32> to vector<16x24xf32>
    %55 = arith.mulf %54, %4 : vector<16x24xf32>
    %cst_26 = arith.constant dense<0.000000e+00> : vector<24x24xf32>
    %56 = tpu.matmul %5, %55, %cst_26 {dimension_numbers = #tpu.dot_dimension_numbers<[1], [0], [0], [1], [0, 0, 1, 1], [], []>} : vector<24x16xf32>, vector<16x24xf32>, vector<24x24xf32> -> vector<24x24xf32>
    %57 = arith.mulf %56, %3 : vector<24x24xf32>
    %58 = vector.extract_strided_slice %1 {offsets = [24, 0], sizes = [24, 6], strides = [1, 1]} : vector<48x6xf32> to vector<24x6xf32>
    %cst_27 = arith.constant dense<0.000000e+00> : vector<24x6xf32>
    %59 = tpu.matmul %57, %58, %cst_27 {dimension_numbers = #tpu.dot_dimension_numbers<[1], [0], [0], [1], [0, 0, 1, 1], [], []>} : vector<24x24xf32>, vector<24x6xf32>, vector<24x6xf32> -> vector<24x6xf32>
    %60 = tpu.concatenate %52, %59 in 0 : vector<24x6xf32>, vector<24x6xf32> -> vector<48x6xf32>
    %cst_28 = arith.constant dense<0.000000e+00> : vector<48x16xf32>
    %61 = tpu.matmul %60, %17, %cst_28 {dimension_numbers = #tpu.dot_dimension_numbers<[1], [0], [0], [1], [0, 0, 1, 1], [], []>} : vector<48x6xf32>, vector<6x16xf32>, vector<48x16xf32> -> vector<48x16xf32>
    %62 = vector.broadcast %10 : vector<1x16xf32> to vector<48x16xf32>
    %63 = arith.addf %61, %62 : vector<48x16xf32>
    %cst_29 = arith.constant 0.000000e+00 : f32
    %64 = vector.broadcast %cst_29 : f32 to vector<48x16xf32>
    %65 = arith.maximumf %63, %64 : vector<48x16xf32>
    %c0_30 = arith.constant 0 : index
    %c0_31 = arith.constant 0 : index
    %66 = vector.load %arg8[%c0_30, %c0_31] : memref<16x16xf32, #tpu.memory_space<vmem>>, vector<16x16xf32>
    %67 = vector.broadcast %11 : vector<1x16xf32> to vector<48x16xf32>
    %68 = arith.mulf %65, %67 : vector<48x16xf32>
    %cst_32 = arith.constant dense<0.000000e+00> : vector<48xf32>
    %69 = vector.multi_reduction <add>, %68, %cst_32 [1] : vector<48x16xf32> to vector<48xf32>
    %70 = vector.shape_cast %69 : vector<48xf32> to vector<48x1xf32>
    %71 = vector.extract_strided_slice %70 {offsets = [0, 0], sizes = [24, 1], strides = [1, 1]} : vector<48x1xf32> to vector<24x1xf32>
    %72 = vector.broadcast %71 : vector<24x1xf32> to vector<24x16xf32>
    %73 = arith.mulf %72, %5 : vector<24x16xf32>
    %cst_33 = arith.constant dense<0.000000e+00> : vector<16x16xf32>
    %74 = tpu.matmul %4, %73, %cst_33 {dimension_numbers = #tpu.dot_dimension_numbers<[1], [0], [0], [1], [0, 0, 1, 1], [], []>} : vector<16x24xf32>, vector<24x16xf32>, vector<16x16xf32> -> vector<16x16xf32>
    %75 = arith.mulf %74, %2 : vector<16x16xf32>
    %76 = vector.extract_strided_slice %41 {offsets = [0, 0], sizes = [16, 16], strides = [1, 1]} : vector<32x16xf32> to vector<16x16xf32>
    %cst_34 = arith.constant dense<0.000000e+00> : vector<16x16xf32>
    %77 = tpu.matmul %75, %76, %cst_34 {dimension_numbers = #tpu.dot_dimension_numbers<[1], [0], [0], [1], [0, 0, 1, 1], [], []>} : vector<16x16xf32>, vector<16x16xf32>, vector<16x16xf32> -> vector<16x16xf32>
    %78 = vector.extract_strided_slice %70 {offsets = [24, 0], sizes = [24, 1], strides = [1, 1]} : vector<48x1xf32> to vector<24x1xf32>
    %79 = vector.broadcast %78 : vector<24x1xf32> to vector<24x16xf32>
    %80 = arith.mulf %79, %5 : vector<24x16xf32>
    %cst_35 = arith.constant dense<0.000000e+00> : vector<16x16xf32>
    %81 = tpu.matmul %4, %80, %cst_35 {dimension_numbers = #tpu.dot_dimension_numbers<[1], [0], [0], [1], [0, 0, 1, 1], [], []>} : vector<16x24xf32>, vector<24x16xf32>, vector<16x16xf32> -> vector<16x16xf32>
    %82 = arith.mulf %81, %2 : vector<16x16xf32>
    %83 = vector.extract_strided_slice %41 {offsets = [16, 0], sizes = [16, 16], strides = [1, 1]} : vector<32x16xf32> to vector<16x16xf32>
    %cst_36 = arith.constant dense<0.000000e+00> : vector<16x16xf32>
    %84 = tpu.matmul %82, %83, %cst_36 {dimension_numbers = #tpu.dot_dimension_numbers<[1], [0], [0], [1], [0, 0, 1, 1], [], []>} : vector<16x16xf32>, vector<16x16xf32>, vector<16x16xf32> -> vector<16x16xf32>
    %85 = tpu.concatenate %77, %84 in 0 : vector<16x16xf32>, vector<16x16xf32> -> vector<32x16xf32>
    %cst_37 = arith.constant dense<0.000000e+00> : vector<32x16xf32>
    %86 = tpu.matmul %85, %66, %cst_37 {dimension_numbers = #tpu.dot_dimension_numbers<[1], [0], [0], [1], [0, 0, 1, 1], [], []>} : vector<32x16xf32>, vector<16x16xf32>, vector<32x16xf32> -> vector<32x16xf32>
    %87 = vector.broadcast %12 : vector<1x16xf32> to vector<32x16xf32>
    %88 = arith.addf %86, %87 : vector<32x16xf32>
    %cst_38 = arith.constant 0.000000e+00 : f32
    %89 = vector.broadcast %cst_38 : f32 to vector<32x16xf32>
    %90 = arith.maximumf %88, %89 : vector<32x16xf32>
    %c0_39 = arith.constant 0 : index
    %c0_40 = arith.constant 0 : index
    %91 = vector.load %arg10[%c0_39, %c0_40] : memref<16x16xf32, #tpu.memory_space<vmem>>, vector<16x16xf32>
    %cst_41 = arith.constant dense<0.000000e+00> : vector<32x16xf32>
    %92 = tpu.matmul %90, %91, %cst_41 {dimension_numbers = #tpu.dot_dimension_numbers<[1], [0], [0], [1], [0, 0, 1, 1], [], []>} : vector<32x16xf32>, vector<16x16xf32>, vector<32x16xf32> -> vector<32x16xf32>
    %93 = vector.broadcast %13 : vector<1x16xf32> to vector<32x16xf32>
    %94 = arith.addf %92, %93 : vector<32x16xf32>
    %cst_42 = arith.constant 0.000000e+00 : f32
    %95 = vector.broadcast %cst_42 : f32 to vector<32x16xf32>
    %96 = arith.maximumf %94, %95 : vector<32x16xf32>
    %c0_43 = arith.constant 0 : index
    %c0_44 = arith.constant 0 : index
    %97 = vector.load %arg12[%c0_43, %c0_44] : memref<2x32xf32, #tpu.memory_space<vmem>>, vector<2x32xf32>
    %cst_45 = arith.constant dense<0.000000e+00> : vector<2x16xf32>
    %98 = tpu.matmul %97, %96, %cst_45 {dimension_numbers = #tpu.dot_dimension_numbers<[1], [0], [0], [1], [0, 0, 1, 1], [], []>} : vector<2x32xf32>, vector<32x16xf32>, vector<2x16xf32> -> vector<2x16xf32>
    %99 = vector.broadcast %14 : vector<1x16xf32> to vector<2x16xf32>
    %100 = arith.mulf %98, %99 : vector<2x16xf32>
    %cst_46 = arith.constant dense<0.000000e+00> : vector<2xf32>
    %101 = vector.multi_reduction <add>, %100, %cst_46 [1] : vector<2x16xf32> to vector<2xf32>
    %102 = vector.shape_cast %101 : vector<2xf32> to vector<2x1xf32>
    %103 = vector.broadcast %15 : vector<1x1xf32> to vector<2x1xf32>
    %104 = arith.addf %102, %103 : vector<2x1xf32>
    %c0_47 = arith.constant 0 : index
    %c0_48 = arith.constant 0 : index
    %105 = vector.load %arg13[%c0_47, %c0_48] : memref<2x1xf32, #tpu.memory_space<vmem>>, vector<2x1xf32>
    tpu.vector_store %arg13[%c0_47, %c0_48], %104 {strides = array<i32>} : memref<2x1xf32, #tpu.memory_space<vmem>>, vector<2x1xf32>,
    return
  }
}

</mosaic_0001>

<llo_original>
// kernel: tpu_custom_call.1
$region0: #{tpu_custom_call.1}
  #allocation0 [shape = 'u32[]', space=smem, size = 0x4, offset = 0x4, fixed_abs, tag = 'smem constant byte address 0x4 - core index']
  #allocation1 [shape = 'u32[144,128]{1,0:T(1,128)}', space=vmem, size = 0x12000, scoped, tag = 'internal scratch']
  %s0 = inlined_call_operand.vmem [shape: f32[32,8], index: 0, kind: input, shape index: {}]
  %s1 = inlined_call_operand.vmem [shape: f32[48,6], index: 1, kind: input, shape index: {}]
  %s2 = inlined_call_operand.vmem [shape: f32[16,16], index: 2, kind: input, shape index: {}]
  %s3 = inlined_call_operand.vmem [shape: f32[24,24], index: 3, kind: input, shape index: {}]
  %s4 = inlined_call_operand.vmem [shape: f32[16,24], index: 4, kind: input, shape index: {}]
  %s5 = inlined_call_operand.vmem [shape: f32[24,16], index: 5, kind: input, shape index: {}]
  %s6 = inlined_call_operand.vmem [shape: f32[8,16], index: 6, kind: input, shape index: {}]
  %s7 = inlined_call_operand.hbm [shape: f32[6,16], index: 7, kind: input, shape index: {}]
  %s8 = inlined_call_operand.vmem [shape: f32[16,16], index: 8, kind: input, shape index: {}]
  %s9 = inlined_call_operand.vmem [shape: f32[16,16], index: 9, kind: input, shape index: {}]
  %s10 = inlined_call_operand.vmem [shape: f32[16,16], index: 10, kind: input, shape index: {}]
  %s11 = inlined_call_operand.vmem [shape: f32[11,16], index: 11, kind: input, shape index: {}]
  %s12 = inlined_call_operand.vmem [shape: f32[2,32], index: 12, kind: input, shape index: {}]
  %s13 = inlined_call_operand.vmem [shape: f32[2,1], index: 13, kind: output, shape index: {}]
  %s14 = sld [smem:[#allocation0]]
  $region66: #{tpu_custom_call.1} parent=0
    _
  %s16 = ssub.s32 1, %s14
  %s17 = scalar_select 0, %s16, %s14
  $region1: #{tpu_custom_call.1} parent=0
    #allocation2 [shape = 'u8[4096]{0}', space=vmem, size = 0x1000, scoped, tag = 'input window, operand 7, single buffered']
    #allocation3 [shape = 's32[1]{0}', space=sflag, size = 0x4, scoped, tag = 'scoped memory for tpu_custom_call.1']
    %18 = vsyncpa [#allocation3], 0
    // Predicated region
    $region2: #{tpu_custom_call.1} parent=1 // pred_check
      _
    $region3: #{tpu_custom_call.1} parent=1 // pred_check_branch
      %20 = sbr.rel (0) target = $region5
    $region4: #{tpu_custom_call.1} parent=1 // pred_region
      _
    $region5: #{tpu_custom_call.1} parent=1 // pred_fallthru
      _
    // Predicated region
    $region6: #{tpu_custom_call.1} parent=1 // pred_check
      _
    $region7: #{tpu_custom_call.1} parent=1 // pred_check_branch
      %22 = sbr.rel (0) target = $region9
    $region8: #{tpu_custom_call.1} parent=1 // pred_region
      _
    $region9: #{tpu_custom_call.1} parent=1 // pred_fallthru
      _
    // Predicated region
    $region10: #{tpu_custom_call.1} parent=1 // pred_check
      _
    $region11: #{tpu_custom_call.1} parent=1 // pred_check_branch
      %24 = sbr.rel (0) target = $region13
    $region12: #{tpu_custom_call.1} parent=1 // pred_region
      _
    $region13: #{tpu_custom_call.1} parent=1 // pred_fallthru
      _
    // Predicated region
    $region14: #{tpu_custom_call.1} parent=1 // pred_check
      _
    $region15: #{tpu_custom_call.1} parent=1 // pred_check_branch
      %26 = sbr.rel (0) target = $region17
    $region16: #{tpu_custom_call.1} parent=1 // pred_region
      _
    $region17: #{tpu_custom_call.1} parent=1 // pred_fallthru
      _
    // Predicated region
    $region18: #{tpu_custom_call.1} parent=1 // pred_check
      _
    $region19: #{tpu_custom_call.1} parent=1 // pred_check_branch
      %28 = sbr.rel (0) target = $region21
    $region20: #{tpu_custom_call.1} parent=1 // pred_region
      _
    $region21: #{tpu_custom_call.1} parent=1 // pred_fallthru
      _
    // Predicated region
    $region22: #{tpu_custom_call.1} parent=1 // pred_check
      _
    $region23: #{tpu_custom_call.1} parent=1 // pred_check_branch
      %30 = sbr.rel (0) target = $region25
    $region24: #{tpu_custom_call.1} parent=1 // pred_region
      _
    $region25: #{tpu_custom_call.1} parent=1 // pred_fallthru
      _
    // Predicated region
    $region26: #{tpu_custom_call.1} parent=1 // pred_check
      _
    $region27: #{tpu_custom_call.1} parent=1 // pred_check_branch
      %32 = sbr.rel (0) target = $region29
    $region28: #{tpu_custom_call.1} parent=1 // pred_region
      _
    $region29: #{tpu_custom_call.1} parent=1 // pred_fallthru
      _
    // Predicated region
    $region30: #{tpu_custom_call.1} parent=1 // pred_check
      _
    $region31: #{tpu_custom_call.1} parent=1 // pred_check_branch
      %34 = sbr.rel (0) target = $region33
    $region32: #{tpu_custom_call.1} parent=1 // pred_region
      %s36 = ssub.s32 128, 128
      %37 = vsyncadd [#allocation3], %s36
      %s39 = sshll.u32 [#allocation2], 4
      %s40 = int_to_ptr.vmem [resolvable:$true] %s39
      %42 = dma.hbm_to_vmem [thread:$0]  %s7, 128, %s40, [#allocation3]
    $region33: #{tpu_custom_call.1} parent=1 // pred_fallthru
      _
    // Predicated region
    $region34: #{tpu_custom_call.1} parent=1 // pred_check
      _
    $region35: #{tpu_custom_call.1} parent=1 // pred_check_branch
      %44 = sbr.rel (0) target = $region37
    $region36: #{tpu_custom_call.1} parent=1 // pred_region
      _
    $region37: #{tpu_custom_call.1} parent=1 // pred_fallthru
      _
    // Predicated region
    $region38: #{tpu_custom_call.1} parent=1 // pred_check
      _
    $region39: #{tpu_custom_call.1} parent=1 // pred_check_branch
      %46 = sbr.rel (0) target = $region41
    $region40: #{tpu_custom_call.1} parent=1 // pred_region
      _
    $region41: #{tpu_custom_call.1} parent=1 // pred_fallthru
      _
    // Predicated region
    $region42: #{tpu_custom_call.1} parent=1 // pred_check
      _
    $region43: #{tpu_custom_call.1} parent=1 // pred_check_branch
      %48 = sbr.rel (0) target = $region45
    $region44: #{tpu_custom_call.1} parent=1 // pred_region
      _
    $region45: #{tpu_custom_call.1} parent=1 // pred_fallthru
      _
    // Predicated region
    $region46: #{tpu_custom_call.1} parent=1 // pred_check
      _
    $region47: #{tpu_custom_call.1} parent=1 // pred_check_branch
      %50 = sbr.rel (0) target = $region49
    $region48: #{tpu_custom_call.1} parent=1 // pred_region
      _
    $region49: #{tpu_custom_call.1} parent=1 // pred_fallthru
      _
    // Predicated region
    $region50: #{tpu_custom_call.1} parent=1 // pred_check
      _
    $region51: #{tpu_custom_call.1} parent=1 // pred_check_branch
      %52 = sbr.rel (0) target = $region53
    $region52: #{tpu_custom_call.1} parent=1 // pred_region
      _
    $region53: #{tpu_custom_call.1} parent=1 // pred_fallthru
      _
    // Predicated region
    $region54: #{tpu_custom_call.1} parent=1 // pred_check
      _
    $region55: #{tpu_custom_call.1} parent=1 // pred_check_branch
      %54 = sbr.rel (0) target = $region57
    $region56: #{tpu_custom_call.1} parent=1 // pred_region
      %55 = dma.done [#allocation3], 128
    $region57: #{tpu_custom_call.1} parent=1 // pred_fallthru
      _
    %v56 = vld [vmem:[%s0] sm:$0xff]
    %v57 = vld [vmem:[%s0 + $0x8] sm:$0xff]
    %v58 = vld [vmem:[%s0 + $0x10] sm:$0xff]
    %v59 = vld [vmem:[%s0 + $0x18] sm:$0xff]
    %v60 = vld [vmem:[%s1] sm:$0xff]
    %v61 = vld [vmem:[%s1 + $0x8] sm:$0xff]
    %v62 = vld [vmem:[%s1 + $0x10] sm:$0xff]
    %v63 = vld [vmem:[%s1 + $0x18] sm:$0xff]
    %v64 = vld [vmem:[%s1 + $0x20] sm:$0xff]
    %v65 = vld [vmem:[%s1 + $0x28] sm:$0xff]
    %v66 = vld [vmem:[%s2] sm:$0xff]
    %v67 = vld [vmem:[%s2 + $0x8] sm:$0xff]
    %v68 = vld [vmem:[%s3] sm:$0xff]
    %v69 = vld [vmem:[%s3 + $0x8] sm:$0xff]
    %v70 = vld [vmem:[%s3 + $0x10] sm:$0xff]
    %v71 = vld [vmem:[%s4] sm:$0xff]
    %v72 = vld [vmem:[%s4 + $0x8] sm:$0xff]
    %v73 = vld [vmem:[%s5] sm:$0xff]
    %v74 = vld [vmem:[%s5 + $0x8] sm:$0xff]
    %v75 = vld [vmem:[%s5 + $0x10] sm:$0xff]
    %v76 = vld [vmem:[%s11] sm:$0xff]
    %v77 = vld [vmem:[%s11 + $0x8] sm:$0x7]
    %v78 = vld [vmem:[%s6] sm:$0xff]
    %v79 = vld [vmem:[#allocation2] sm:$0x3f]
    %v80 = vlaneseq
    %v81 = vshrl.u32 %v80, 7
    %v82 = vsub.s32 0, %v81
    %v83 = vrot.slane %v76, %v82
    %v84 = vmul.f32 %v60, %v83
    %v85 = vmul.f32 %v61, %v83
    %v86 = vmul.f32 %v62, %v83
    %v87 = vmul.f32 %v63, %v83
    %v88 = vmul.f32 %v64, %v83
    %v89 = vmul.f32 %v65, %v83
    %vm90 = vcmask 48128
    %v91 = vsel %vm90, %v84, 0.0
    %92 = vadd.xlane.f32.xlu0 %v91
    %v93 = vpop.xlane.xlu0 %92
    %v94 = vsel %vm90, %v85, 0.0
    %95 = vadd.xlane.f32.xlu0 %v94
    %v96 = vpop.xlane.xlu0 %95
    %v97 = vsel %vm90, %v86, 0.0
    %98 = vadd.xlane.f32.xlu0 %v97
    %v99 = vpop.xlane.xlu0 %98
    %v100 = vsel %vm90, %v87, 0.0
    %101 = vadd.xlane.f32.xlu0 %v100
    %v102 = vpop.xlane.xlu0 %101
    %v103 = vsel %vm90, %v88, 0.0
    %104 = vadd.xlane.f32.xlu0 %v103
    %v105 = vpop.xlane.xlu0 %104
    %v106 = vsel %vm90, %v89, 0.0
    %107 = vadd.xlane.f32.xlu0 %v106
    %v108 = vpop.xlane.xlu0 %107
    %v109 = vmul.f32 %v93, %v73
    %v110 = vmul.f32 %v96, %v74
    %v111 = vmul.f32 %v99, %v75
    %vm112 = vcmask 195584
    %v114 = vsel %vm112, %v71, 0
    %v117 = vsel %vm112, %v72, 0
    %119 = vmatprep.subr.mxu0 0.0
    %120 = vmatpush1.msra.mxu0 0.0
    %121 = vmatprep.subr.mxu0 0.0
    %122 = vmatpush1.msra.mxu0 0.0
    %123 = vmatprep.subr.mxu0 0.0
    %124 = vmatpush1.msra.mxu0 0.0
    %125 = vmatprep.subr.mxu0 0.0
    %126 = vmatpush1.msra.mxu0 0.0
    %127 = vmatprep.subr.mxu0 0.0
    %128 = vmatpush1.msra.mxu0 0.0
    %129 = vmatprep.subr.mxu0 0.0
    %130 = vmatpush1.msra.mxu0 0.0
    %131 = vmatprep.subr.mxu0 0.0
    %132 = vmatpush1.msra.mxu0 0.0
    %133 = vmatprep.subr.mxu0 0.0
    %134 = vmatpush1.msra.mxu0 0.0
    %135 = vmatprep.subr.mxu0 0.0
    %136 = vmatpush1.msra.mxu0 0.0
    %137 = vmatprep.subr.mxu0 0.0
    %138 = vmatpush1.msra.mxu0 0.0
    %139 = vmatprep.subr.mxu0 0.0
    %140 = vmatpush1.msra.mxu0 0.0
    %141 = vmatprep.subr.mxu0 0.0
    %142 = vmatpush1.msra.mxu0 0.0
    %143 = vmatprep.subr.mxu0 0.0
    %144 = vmatpush1.msra.mxu0 0.0
    %145 = vmatprep.subr.mxu0 0.0
    %146 = vmatpush1.msra.mxu0 %v111
    %147 = vmatprep.subr.mxu0 0.0
    %148 = vmatpush1.msra.mxu0 %v110
    %149 = vmatprep.subr.mxu0 0.0
    %150 = vmatpush1.msra.mxu0 %v109
    %151 = vmatprep.subr.mxu0 0.0
    %152 = vmatpush2.msra.mxu0 0.0
    %153 = vmatprep.subr.mxu0 0.0
    %154 = vmatpush2.msra.mxu0 0.0
    %155 = vmatprep.subr.mxu0 0.0
    %156 = vmatpush2.msra.mxu0 0.0
    %157 = vmatprep.subr.mxu0 0.0
    %158 = vmatpush2.msra.mxu0 0.0
    %159 = vmatprep.subr.mxu0 0.0
    %160 = vmatpush2.msra.mxu0 0.0
    %161 = vmatprep.subr.mxu0 0.0
    %162 = vmatpush2.msra.mxu0 0.0
    %163 = vmatprep.subr.mxu0 0.0
    %164 = vmatpush2.msra.mxu0 0.0
    %165 = vmatprep.subr.mxu0 0.0
    %166 = vmatpush2.msra.mxu0 0.0
    %167 = vmatprep.subr.mxu0 0.0
    %168 = vmatpush2.msra.mxu0 0.0
    %169 = vmatprep.subr.mxu0 0.0
    %170 = vmatpush2.msra.mxu0 0.0
    %171 = vmatprep.subr.mxu0 0.0
    %172 = vmatpush2.msra.mxu0 0.0
    %173 = vmatprep.subr.mxu0 0.0
    %174 = vmatpush2.msra.mxu0 0.0
    %175 = vmatprep.subr.mxu0 0.0
    %176 = vmatpush2.msra.mxu0 0.0
    %177 = vmatprep.subr.mxu0 0.0
    %178 = vmatpush2.msra.mxu0 0.0
    %179 = vmatprep.subr.mxu0 0.0
    %180 = vmatpush2.msra.mxu0 0.0
    %181 = vmatprep.subr.mxu0 0.0
    %182 = vmatpush2.msra.mxu0 0.0
    %183 = vmatprep.mubr.f32.mxu0 0.0
    %184 = vmatmul.mubr.f32.gmra.mxu0 %v114
    %v185 = vpop.f32.mrf.mxu0
    %v186 = vadd.f32 0.0, %v185
    %v187 = vpop.f32.mrf.mxu0
    %188 = vmatprep.mubr.f32.mxu0 0.0
    %189 = vmatmul.mubr.f32.gmra.mxu0 %v117
    %v190 = vpop.f32.mrf.mxu0
    %v191 = vadd.f32 0.0, %v190
    %v192 = vpop.f32.mrf.mxu0
    %193 = vdwg.mxu0
    %v194 = vmul.f32 %v186, %v66
    %v195 = vmul.f32 %v191, %v67
    %vm196 = vcmask 130048
    %v198 = vsel %vm196, %v194, 0
    %v201 = vsel %vm196, %v195, 0
    %203 = vmatprep.subr.mxu0 0.0
    %204 = vmatpush1.msra.mxu0 0.0
    %205 = vmatprep.subr.mxu0 0.0
    %206 = vmatpush1.msra.mxu0 0.0
    %207 = vmatprep.subr.mxu0 0.0
    %208 = vmatpush1.msra.mxu0 0.0
    %209 = vmatprep.subr.mxu0 0.0
    %210 = vmatpush1.msra.mxu0 0.0
    %211 = vmatprep.subr.mxu0 0.0
    %212 = vmatpush1.msra.mxu0 0.0
    %213 = vmatprep.subr.mxu0 0.0
    %214 = vmatpush1.msra.mxu0 0.0
    %215 = vmatprep.subr.mxu0 0.0
    %216 = vmatpush1.msra.mxu0 0.0
    %217 = vmatprep.subr.mxu0 0.0
    %218 = vmatpush1.msra.mxu0 0.0
    %219 = vmatprep.subr.mxu0 0.0
    %220 = vmatpush1.msra.mxu0 0.0
    %221 = vmatprep.subr.mxu0 0.0
    %222 = vmatpush1.msra.mxu0 0.0
    %223 = vmatprep.subr.mxu0 0.0
    %224 = vmatpush1.msra.mxu0 0.0
    %225 = vmatprep.subr.mxu0 0.0
    %226 = vmatpush1.msra.mxu0 0.0
    %227 = vmatprep.subr.mxu0 0.0
    %228 = vmatpush1.msra.mxu0 0.0
    %229 = vmatprep.subr.mxu0 0.0
    %230 = vmatpush1.msra.mxu0 0.0
    %231 = vmatprep.subr.mxu0 0.0
    %232 = vmatpush1.msra.mxu0 %v57
    %233 = vmatprep.subr.mxu0 0.0
    %234 = vmatpush1.msra.mxu0 %v56
    %235 = vmatprep.subr.mxu0 0.0
    %236 = vmatpush2.msra.mxu0 0.0
    %237 = vmatprep.subr.mxu0 0.0
    %238 = vmatpush2.msra.mxu0 0.0
    %239 = vmatprep.subr.mxu0 0.0
    %240 = vmatpush2.msra.mxu0 0.0
    %241 = vmatprep.subr.mxu0 0.0
    %242 = vmatpush2.msra.mxu0 0.0
    %243 = vmatprep.subr.mxu0 0.0
    %244 = vmatpush2.msra.mxu0 0.0
    %245 = vmatprep.subr.mxu0 0.0
    %246 = vmatpush2.msra.mxu0 0.0
    %247 = vmatprep.subr.mxu0 0.0
    %248 = vmatpush2.msra.mxu0 0.0
    %249 = vmatprep.subr.mxu0 0.0
    %250 = vmatpush2.msra.mxu0 0.0
    %251 = vmatprep.subr.mxu0 0.0
    %252 = vmatpush2.msra.mxu0 0.0
    %253 = vmatprep.subr.mxu0 0.0
    %254 = vmatpush2.msra.mxu0 0.0
    %255 = vmatprep.subr.mxu0 0.0
    %256 = vmatpush2.msra.mxu0 0.0
    %257 = vmatprep.subr.mxu0 0.0
    %258 = vmatpush2.msra.mxu0 0.0
    %259 = vmatprep.subr.mxu0 0.0
    %260 = vmatpush2.msra.mxu0 0.0
    %261 = vmatprep.subr.mxu0 0.0
    %262 = vmatpush2.msra.mxu0 0.0
    %263 = vmatprep.subr.mxu0 0.0
    %264 = vmatpush2.msra.mxu0 0.0
    %265 = vmatprep.subr.mxu0 0.0
    %266 = vmatpush2.msra.mxu0 0.0
    %267 = vmatprep.mubr.f32.mxu0 0.0
    %268 = vmatmul.mubr.f32.gmra.mxu0 %v198
    %v269 = vpop.f32.mrf.mxu0
    %v270 = vadd.f32 0.0, %v269
    %v271 = vpop.f32.mrf.mxu0
    %272 = vmatprep.mubr.f32.mxu0 0.0
    %273 = vmatmul.mubr.f32.gmra.mxu0 %v201
    %v274 = vpop.f32.mrf.mxu0
    %v275 = vadd.f32 0.0, %v274
    %v276 = vpop.f32.mrf.mxu0
    %277 = vdwg.mxu0
    %v278 = vmul.f32 %v102, %v73
    %v279 = vmul.f32 %v105, %v74
    %v280 = vmul.f32 %v108, %v75
    %281 = vmatprep.subr.mxu0 0.0
    %282 = vmatpush1.msra.mxu0 0.0
    %283 = vmatprep.subr.mxu0 0.0
    %284 = vmatpush1.msra.mxu0 0.0
    %285 = vmatprep.subr.mxu0 0.0
    %286 = vmatpush1.msra.mxu0 0.0
    %287 = vmatprep.subr.mxu0 0.0
    %288 = vmatpush1.msra.mxu0 0.0
    %289 = vmatprep.subr.mxu0 0.0
    %290 = vmatpush1.msra.mxu0 0.0
    %291 = vmatprep.subr.mxu0 0.0
    %292 = vmatpush1.msra.mxu0 0.0
    %293 = vmatprep.subr.mxu0 0.0
    %294 = vmatpush1.msra.mxu0 0.0
    %295 = vmatprep.subr.mxu0 0.0
    %296 = vmatpush1.msra.mxu0 0.0
    %297 = vmatprep.subr.mxu0 0.0
    %298 = vmatpush1.msra.mxu0 0.0
    %299 = vmatprep.subr.mxu0 0.0
    %300 = vmatpush1.msra.mxu0 0.0
    %301 = vmatprep.subr.mxu0 0.0
    %302 = vmatpush1.msra.mxu0 0.0
    %303 = vmatprep.subr.mxu0 0.0
    %304 = vmatpush1.msra.mxu0 0.0
    %305 = vmatprep.subr.mxu0 0.0
    %306 = vmatpush1.msra.mxu0 0.0
    %307 = vmatprep.subr.mxu0 0.0
    %308 = vmatpush1.msra.mxu0 %v280
    %309 = vmatprep.subr.mxu0 0.0
    %310 = vmatpush1.msra.mxu0 %v279
    %311 = vmatprep.subr.mxu0 0.0
    %312 = vmatpush1.msra.mxu0 %v278
    %313 = vmatprep.subr.mxu0 0.0
    %314 = vmatpush2.msra.mxu0 0.0
    %315 = vmatprep.subr.mxu0 0.0
    %316 = vmatpush2.msra.mxu0 0.0
    %317 = vmatprep.subr.mxu0 0.0
    %318 = vmatpush2.msra.mxu0 0.0
    %319 = vmatprep.subr.mxu0 0.0
    %320 = vmatpush2.msra.mxu0 0.0
    %321 = vmatprep.subr.mxu0 0.0
    %322 = vmatpush2.msra.mxu0 0.0
    %323 = vmatprep.subr.mxu0 0.0
    %324 = vmatpush2.msra.mxu0 0.0
    %325 = vmatprep.subr.mxu0 0.0
    %326 = vmatpush2.msra.mxu0 0.0
    %327 = vmatprep.subr.mxu0 0.0
    %328 = vmatpush2.msra.mxu0 0.0
    %329 = vmatprep.subr.mxu0 0.0
    %330 = vmatpush2.msra.mxu0 0.0
    %331 = vmatprep.subr.mxu0 0.0
    %332 = vmatpush2.msra.mxu0 0.0
    %333 = vmatprep.subr.mxu0 0.0
    %334 = vmatpush2.msra.mxu0 0.0
    %335 = vmatprep.subr.mxu0 0.0
    %336 = vmatpush2.msra.mxu0 0.0
    %337 = vmatprep.subr.mxu0 0.0
    %338 = vmatpush2.msra.mxu0 0.0
    %339 = vmatprep.subr.mxu0 0.0
    %340 = vmatpush2.msra.mxu0 0.0
    %341 = vmatprep.subr.mxu0 0.0
    %342 = vmatpush2.msra.mxu0 0.0
    %343 = vmatprep.subr.mxu0 0.0
    %344 = vmatpush2.msra.mxu0 0.0
    %345 = vmatprep.mubr.f32.mxu0 0.0
    %346 = vmatmul.mubr.f32.gmra.mxu0 %v114
    %v347 = vpop.f32.mrf.mxu0
    %v348 = vadd.f32 0.0, %v347
    %v349 = vpop.f32.mrf.mxu0
    %350 = vmatprep.mubr.f32.mxu0 0.0
    %351 = vmatmul.mubr.f32.gmra.mxu0 %v117
    %v352 = vpop.f32.mrf.mxu0
    %v353 = vadd.f32 0.0, %v352
    %v354 = vpop.f32.mrf.mxu0
    %355 = vdwg.mxu0
    %v356 = vmul.f32 %v348, %v66
    %v357 = vmul.f32 %v353, %v67
    %v359 = vsel %vm196, %v356, 0
    %v362 = vsel %vm196, %v357, 0
    %364 = vmatprep.subr.mxu0 0.0
    %365 = vmatpush1.msra.mxu0 0.0
    %366 = vmatprep.subr.mxu0 0.0
    %367 = vmatpush1.msra.mxu0 0.0
    %368 = vmatprep.subr.mxu0 0.0
    %369 = vmatpush1.msra.mxu0 0.0
    %370 = vmatprep.subr.mxu0 0.0
    %371 = vmatpush1.msra.mxu0 0.0
    %372 = vmatprep.subr.mxu0 0.0
    %373 = vmatpush1.msra.mxu0 0.0
    %374 = vmatprep.subr.mxu0 0.0
    %375 = vmatpush1.msra.mxu0 0.0
    %376 = vmatprep.subr.mxu0 0.0
    %377 = vmatpush1.msra.mxu0 0.0
    %378 = vmatprep.subr.mxu0 0.0
    %379 = vmatpush1.msra.mxu0 0.0
    %380 = vmatprep.subr.mxu0 0.0
    %381 = vmatpush1.msra.mxu0 0.0
    %382 = vmatprep.subr.mxu0 0.0
    %383 = vmatpush1.msra.mxu0 0.0
    %384 = vmatprep.subr.mxu0 0.0
    %385 = vmatpush1.msra.mxu0 0.0
    %386 = vmatprep.subr.mxu0 0.0
    %387 = vmatpush1.msra.mxu0 0.0
    %388 = vmatprep.subr.mxu0 0.0
    %389 = vmatpush1.msra.mxu0 0.0
    %390 = vmatprep.subr.mxu0 0.0
    %391 = vmatpush1.msra.mxu0 0.0
    %392 = vmatprep.subr.mxu0 0.0
    %393 = vmatpush1.msra.mxu0 %v59
    %394 = vmatprep.subr.mxu0 0.0
    %395 = vmatpush1.msra.mxu0 %v58
    %396 = vmatprep.subr.mxu0 0.0
    %397 = vmatpush2.msra.mxu0 0.0
    %398 = vmatprep.subr.mxu0 0.0
    %399 = vmatpush2.msra.mxu0 0.0
    %400 = vmatprep.subr.mxu0 0.0
    %401 = vmatpush2.msra.mxu0 0.0
    %402 = vmatprep.subr.mxu0 0.0
    %403 = vmatpush2.msra.mxu0 0.0
    %404 = vmatprep.subr.mxu0 0.0
    %405 = vmatpush2.msra.mxu0 0.0
    %406 = vmatprep.subr.mxu0 0.0
    %407 = vmatpush2.msra.mxu0 0.0
    %408 = vmatprep.subr.mxu0 0.0
    %409 = vmatpush2.msra.mxu0 0.0
    %410 = vmatprep.subr.mxu0 0.0
    %411 = vmatpush2.msra.mxu0 0.0
    %412 = vmatprep.subr.mxu0 0.0
    %413 = vmatpush2.msra.mxu0 0.0
    %414 = vmatprep.subr.mxu0 0.0
    %415 = vmatpush2.msra.mxu0 0.0
    %416 = vmatprep.subr.mxu0 0.0
    %417 = vmatpush2.msra.mxu0 0.0
    %418 = vmatprep.subr.mxu0 0.0
    %419 = vmatpush2.msra.mxu0 0.0
    %420 = vmatprep.subr.mxu0 0.0
    %421 = vmatpush2.msra.mxu0 0.0
    %422 = vmatprep.subr.mxu0 0.0
    %423 = vmatpush2.msra.mxu0 0.0
    %424 = vmatprep.subr.mxu0 0.0
    %425 = vmatpush2.msra.mxu0 0.0
    %426 = vmatprep.subr.mxu0 0.0
    %427 = vmatpush2.msra.mxu0 0.0
    %428 = vmatprep.mubr.f32.mxu0 0.0
    %429 = vmatmul.mubr.f32.gmra.mxu0 %v359
    %v430 = vpop.f32.mrf.mxu0
    %v431 = vadd.f32 0.0, %v430
    %v432 = vpop.f32.mrf.mxu0
    %433 = vmatprep.mubr.f32.mxu0 0.0
    %434 = vmatmul.mubr.f32.gmra.mxu0 %v362
    %v435 = vpop.f32.mrf.mxu0
    %v436 = vadd.f32 0.0, %v435
    %v437 = vpop.f32.mrf.mxu0
    %438 = vdwg.mxu0
    %v439 = vlaneseq
    %v440 = vshrl.u32 %v439, 7
    %v441 = vsub.s32 1, %v440
    %v442 = vrot.slane %v76, %v441
    %vm443 = vcmask 64512
    %v445 = vsel %vm443, %v270, 0
    %v448 = vsel %vm443, %v275, 0
    %v451 = vsel %vm443, %v431, 0
    %v454 = vsel %vm443, %v436, 0
    %456 = vmatprep.subr.mxu0 0.0
    %457 = vmatpush1.msra.mxu0 0.0
    %458 = vmatprep.subr.mxu0 0.0
    %459 = vmatpush1.msra.mxu0 0.0
    %460 = vmatprep.subr.mxu0 0.0
    %461 = vmatpush1.msra.mxu0 0.0
    %462 = vmatprep.subr.mxu0 0.0
    %463 = vmatpush1.msra.mxu0 0.0
    %464 = vmatprep.subr.mxu0 0.0
    %465 = vmatpush1.msra.mxu0 0.0
    %466 = vmatprep.subr.mxu0 0.0
    %467 = vmatpush1.msra.mxu0 0.0
    %468 = vmatprep.subr.mxu0 0.0
    %469 = vmatpush1.msra.mxu0 0.0
    %470 = vmatprep.subr.mxu0 0.0
    %471 = vmatpush1.msra.mxu0 0.0
    %472 = vmatprep.subr.mxu0 0.0
    %473 = vmatpush1.msra.mxu0 0.0
    %474 = vmatprep.subr.mxu0 0.0
    %475 = vmatpush1.msra.mxu0 0.0
    %476 = vmatprep.subr.mxu0 0.0
    %477 = vmatpush1.msra.mxu0 0.0
    %478 = vmatprep.subr.mxu0 0.0
    %479 = vmatpush1.msra.mxu0 0.0
    %480 = vmatprep.subr.mxu0 0.0
    %481 = vmatpush1.msra.mxu0 0.0
    %482 = vmatprep.subr.mxu0 0.0
    %483 = vmatpush1.msra.mxu0 0.0
    %484 = vmatprep.subr.mxu0 0.0
    %485 = vmatpush1.msra.mxu0 0.0
    %486 = vmatprep.subr.mxu0 0.0
    %487 = vmatpush1.msra.mxu0 %v78
    %488 = vmatprep.subr.mxu0 0.0
    %489 = vmatpush2.msra.mxu0 0.0
    %490 = vmatprep.subr.mxu0 0.0
    %491 = vmatpush2.msra.mxu0 0.0
    %492 = vmatprep.subr.mxu0 0.0
    %493 = vmatpush2.msra.mxu0 0.0
    %494 = vmatprep.subr.mxu0 0.0
    %495 = vmatpush2.msra.mxu0 0.0
    %496 = vmatprep.subr.mxu0 0.0
    %497 = vmatpush2.msra.mxu0 0.0
    %498 = vmatprep.subr.mxu0 0.0
    %499 = vmatpush2.msra.mxu0 0.0
    %500 = vmatprep.subr.mxu0 0.0
    %501 = vmatpush2.msra.mxu0 0.0
    %502 = vmatprep.subr.mxu0 0.0
    %503 = vmatpush2.msra.mxu0 0.0
    %504 = vmatprep.subr.mxu0 0.0
    %505 = vmatpush2.msra.mxu0 0.0
    %506 = vmatprep.subr.mxu0 0.0
    %507 = vmatpush2.msra.mxu0 0.0
    %508 = vmatprep.subr.mxu0 0.0
    %509 = vmatpush2.msra.mxu0 0.0
    %510 = vmatprep.subr.mxu0 0.0
    %511 = vmatpush2.msra.mxu0 0.0
    %512 = vmatprep.subr.mxu0 0.0
    %513 = vmatpush2.msra.mxu0 0.0
    %514 = vmatprep.subr.mxu0 0.0
    %515 = vmatpush2.msra.mxu0 0.0
    %516 = vmatprep.subr.mxu0 0.0
    %517 = vmatpush2.msra.mxu0 0.0
    %518 = vmatprep.subr.mxu0 0.0
    %519 = vmatpush2.msra.mxu0 0.0
    %520 = vmatprep.mubr.f32.mxu0 0.0
    %521 = vmatmul.mubr.f32.gmra.mxu0 %v445
    %v522 = vpop.f32.mrf.mxu0
    %v523 = vadd.f32 %v442, %v522
    %v524 = vpop.f32.mrf.mxu0
    %525 = vmatprep.mubr.f32.mxu0 0.0
    %526 = vmatmul.mubr.f32.gmra.mxu0 %v448
    %v527 = vpop.f32.mrf.mxu0
    %v528 = vadd.f32 %v442, %v527
    %v529 = vpop.f32.mrf.mxu0
    %530 = vmatprep.mubr.f32.mxu0 0.0
    %531 = vmatmul.mubr.f32.gmra.mxu0 %v451
    %v532 = vpop.f32.mrf.mxu0
    %v533 = vadd.f32 %v442, %v532
    %v534 = vpop.f32.mrf.mxu0
    %535 = vmatprep.mubr.f32.mxu0 0.0
    %536 = vmatmul.mubr.f32.gmra.mxu0 %v454
    %v537 = vpop.f32.mrf.mxu0
    %v538 = vadd.f32 %v442, %v537
    %v539 = vpop.f32.mrf.mxu0
    %540 = vdwg.mxu0
    %v541 = vmax.f32 %v523, 0.0
    %v542 = vmax.f32 %v528, 0.0
    %v543 = vmax.f32 %v533, 0.0
    %v544 = vmax.f32 %v538, 0.0
    %v545 = vlaneseq
    %v546 = vshrl.u32 %v545, 7
    %v547 = vsub.s32 2, %v546
    %v548 = vrot.slane %v76, %v547
    %v549 = vmul.f32 %v541, %v548
    %v550 = vmul.f32 %v542, %v548
    %v551 = vmul.f32 %v543, %v548
    %v552 = vmul.f32 %v544, %v548
    %v553 = vsel %vm196, %v549, 0.0
    %554 = vadd.xlane.f32.xlu0 %v553
    %v555 = vpop.xlane.xlu0 %554
    %v556 = vsel %vm196, %v550, 0.0
    %557 = vadd.xlane.f32.xlu0 %v556
    %v558 = vpop.xlane.xlu0 %557
    %v559 = vsel %vm196, %v551, 0.0
    %560 = vadd.xlane.f32.xlu0 %v559
    %v561 = vpop.xlane.xlu0 %560
    %v562 = vsel %vm196, %v552, 0.0
    %563 = vadd.xlane.f32.xlu0 %v562
    %v564 = vpop.xlane.xlu0 %563
    %v565 = vmul.f32 %v555, %v71
    %v566 = vmul.f32 %v558, %v72
    %v568 = vsel %vm196, %v73, 0
    %v571 = vsel %vm196, %v74, 0
    %v574 = vsel %vm196, %v75, 0
    %576 = vmatprep.subr.mxu0 0.0
    %577 = vmatpush1.msra.mxu0 0.0
    %578 = vmatprep.subr.mxu0 0.0
    %579 = vmatpush1.msra.mxu0 0.0
    %580 = vmatprep.subr.mxu0 0.0
    %581 = vmatpush1.msra.mxu0 0.0
    %582 = vmatprep.subr.mxu0 0.0
    %583 = vmatpush1.msra.mxu0 0.0
    %584 = vmatprep.subr.mxu0 0.0
    %585 = vmatpush1.msra.mxu0 0.0
    %586 = vmatprep.subr.mxu0 0.0
    %587 = vmatpush1.msra.mxu0 0.0
    %588 = vmatprep.subr.mxu0 0.0
    %589 = vmatpush1.msra.mxu0 0.0
    %590 = vmatprep.subr.mxu0 0.0
    %591 = vmatpush1.msra.mxu0 0.0
    %592 = vmatprep.subr.mxu0 0.0
    %593 = vmatpush1.msra.mxu0 0.0
    %594 = vmatprep.subr.mxu0 0.0
    %595 = vmatpush1.msra.mxu0 0.0
    %596 = vmatprep.subr.mxu0 0.0
    %597 = vmatpush1.msra.mxu0 0.0
    %598 = vmatprep.subr.mxu0 0.0
    %599 = vmatpush1.msra.mxu0 0.0
    %600 = vmatprep.subr.mxu0 0.0
    %601 = vmatpush1.msra.mxu0 0.0
    %602 = vmatprep.subr.mxu0 0.0
    %603 = vmatpush1.msra.mxu0 0.0
    %604 = vmatprep.subr.mxu0 0.0
    %605 = vmatpush1.msra.mxu0 %v566
    %606 = vmatprep.subr.mxu0 0.0
    %607 = vmatpush1.msra.mxu0 %v565
    %608 = vmatprep.subr.mxu0 0.0
    %609 = vmatpush2.msra.mxu0 0.0
    %610 = vmatprep.subr.mxu0 0.0
    %611 = vmatpush2.msra.mxu0 0.0
    %612 = vmatprep.subr.mxu0 0.0
    %613 = vmatpush2.msra.mxu0 0.0
    %614 = vmatprep.subr.mxu0 0.0
    %615 = vmatpush2.msra.mxu0 0.0
    %616 = vmatprep.subr.mxu0 0.0
    %617 = vmatpush2.msra.mxu0 0.0
    %618 = vmatprep.subr.mxu0 0.0
    %619 = vmatpush2.msra.mxu0 0.0
    %620 = vmatprep.subr.mxu0 0.0
    %621 = vmatpush2.msra.mxu0 0.0
    %622 = vmatprep.subr.mxu0 0.0
    %623 = vmatpush2.msra.mxu0 0.0
    %624 = vmatprep.subr.mxu0 0.0
    %625 = vmatpush2.msra.mxu0 0.0
    %626 = vmatprep.subr.mxu0 0.0
    %627 = vmatpush2.msra.mxu0 0.0
    %628 = vmatprep.subr.mxu0 0.0
    %629 = vmatpush2.msra.mxu0 0.0
    %630 = vmatprep.subr.mxu0 0.0
    %631 = vmatpush2.msra.mxu0 0.0
    %632 = vmatprep.subr.mxu0 0.0
    %633 = vmatpush2.msra.mxu0 0.0
    %634 = vmatprep.subr.mxu0 0.0
    %635 = vmatpush2.msra.mxu0 0.0
    %636 = vmatprep.subr.mxu0 0.0
    %637 = vmatpush2.msra.mxu0 0.0
    %638 = vmatprep.subr.mxu0 0.0
    %639 = vmatpush2.msra.mxu0 0.0
    %640 = vmatprep.mubr.f32.mxu0 0.0
    %641 = vmatmul.mubr.f32.gmra.mxu0 %v568
    %v642 = vpop.f32.mrf.mxu0
    %v643 = vadd.f32 0.0, %v642
    %v644 = vpop.f32.mrf.mxu0
    %645 = vmatprep.mubr.f32.mxu0 0.0
    %646 = vmatmul.mubr.f32.gmra.mxu0 %v571
    %v647 = vpop.f32.mrf.mxu0
    %v648 = vadd.f32 0.0, %v647
    %v649 = vpop.f32.mrf.mxu0
    %650 = vmatprep.mubr.f32.mxu0 0.0
    %651 = vmatmul.mubr.f32.gmra.mxu0 %v574
    %v652 = vpop.f32.mrf.mxu0
    %v653 = vadd.f32 0.0, %v652
    %v654 = vpop.f32.mrf.mxu0
    %655 = vdwg.mxu0
    %v656 = vmul.f32 %v643, %v68
    %v657 = vmul.f32 %v648, %v69
    %v658 = vmul.f32 %v653, %v70
    %v660 = vsel %vm112, %v656, 0
    %v663 = vsel %vm112, %v657, 0
    %v666 = vsel %vm112, %v658, 0
    %668 = vmatprep.subr.mxu0 0.0
    %669 = vmatpush1.msra.mxu0 0.0
    %670 = vmatprep.subr.mxu0 0.0
    %671 = vmatpush1.msra.mxu0 0.0
    %672 = vmatprep.subr.mxu0 0.0
    %673 = vmatpush1.msra.mxu0 0.0
    %674 = vmatprep.subr.mxu0 0.0
    %675 = vmatpush1.msra.mxu0 0.0
    %676 = vmatprep.subr.mxu0 0.0
    %677 = vmatpush1.msra.mxu0 0.0
    %678 = vmatprep.subr.mxu0 0.0
    %679 = vmatpush1.msra.mxu0 0.0
    %680 = vmatprep.subr.mxu0 0.0
    %681 = vmatpush1.msra.mxu0 0.0
    %682 = vmatprep.subr.mxu0 0.0
    %683 = vmatpush1.msra.mxu0 0.0
    %684 = vmatprep.subr.mxu0 0.0
    %685 = vmatpush1.msra.mxu0 0.0
    %686 = vmatprep.subr.mxu0 0.0
    %687 = vmatpush1.msra.mxu0 0.0
    %688 = vmatprep.subr.mxu0 0.0
    %689 = vmatpush1.msra.mxu0 0.0
    %690 = vmatprep.subr.mxu0 0.0
    %691 = vmatpush1.msra.mxu0 0.0
    %692 = vmatprep.subr.mxu0 0.0
    %693 = vmatpush1.msra.mxu0 0.0
    %694 = vmatprep.subr.mxu0 0.0
    %695 = vmatpush1.msra.mxu0 %v62
    %696 = vmatprep.subr.mxu0 0.0
    %697 = vmatpush1.msra.mxu0 %v61
    %698 = vmatprep.subr.mxu0 0.0
    %699 = vmatpush1.msra.mxu0 %v60
    %700 = vmatprep.subr.mxu0 0.0
    %701 = vmatpush2.msra.mxu0 0.0
    %702 = vmatprep.subr.mxu0 0.0
    %703 = vmatpush2.msra.mxu0 0.0
    %704 = vmatprep.subr.mxu0 0.0
    %705 = vmatpush2.msra.mxu0 0.0
    %706 = vmatprep.subr.mxu0 0.0
    %707 = vmatpush2.msra.mxu0 0.0
    %708 = vmatprep.subr.mxu0 0.0
    %709 = vmatpush2.msra.mxu0 0.0
    %710 = vmatprep.subr.mxu0 0.0
    %711 = vmatpush2.msra.mxu0 0.0
    %712 = vmatprep.subr.mxu0 0.0
    %713 = vmatpush2.msra.mxu0 0.0
    %714 = vmatprep.subr.mxu0 0.0
    %715 = vmatpush2.msra.mxu0 0.0
    %716 = vmatprep.subr.mxu0 0.0
    %717 = vmatpush2.msra.mxu0 0.0
    %718 = vmatprep.subr.mxu0 0.0
    %719 = vmatpush2.msra.mxu0 0.0
    %720 = vmatprep.subr.mxu0 0.0
    %721 = vmatpush2.msra.mxu0 0.0
    %722 = vmatprep.subr.mxu0 0.0
    %723 = vmatpush2.msra.mxu0 0.0
    %724 = vmatprep.subr.mxu0 0.0
    %725 = vmatpush2.msra.mxu0 0.0
    %726 = vmatprep.subr.mxu0 0.0
    %727 = vmatpush2.msra.mxu0 0.0
    %728 = vmatprep.subr.mxu0 0.0
    %729 = vmatpush2.msra.mxu0 0.0
    %730 = vmatprep.subr.mxu0 0.0
    %731 = vmatpush2.msra.mxu0 0.0
    %732 = vmatprep.mubr.f32.mxu0 0.0
    %733 = vmatmul.mubr.f32.gmra.mxu0 %v660
    %v734 = vpop.f32.mrf.mxu0
    %v735 = vadd.f32 0.0, %v734
    %v736 = vpop.f32.mrf.mxu0
    %737 = vmatprep.mubr.f32.mxu0 0.0
    %738 = vmatmul.mubr.f32.gmra.mxu0 %v663
    %v739 = vpop.f32.mrf.mxu0
    %v740 = vadd.f32 0.0, %v739
    %v741 = vpop.f32.mrf.mxu0
    %742 = vmatprep.mubr.f32.mxu0 0.0
    %743 = vmatmul.mubr.f32.gmra.mxu0 %v666
    %v744 = vpop.f32.mrf.mxu0
    %v745 = vadd.f32 0.0, %v744
    %v746 = vpop.f32.mrf.mxu0
    %747 = vdwg.mxu0
    %v748 = vmul.f32 %v561, %v71
    %v749 = vmul.f32 %v564, %v72
    %750 = vmatprep.subr.mxu0 0.0
    %751 = vmatpush1.msra.mxu0 0.0
    %752 = vmatprep.subr.mxu0 0.0
    %753 = vmatpush1.msra.mxu0 0.0
    %754 = vmatprep.subr.mxu0 0.0
    %755 = vmatpush1.msra.mxu0 0.0
    %756 = vmatprep.subr.mxu0 0.0
    %757 = vmatpush1.msra.mxu0 0.0
    %758 = vmatprep.subr.mxu0 0.0
    %759 = vmatpush1.msra.mxu0 0.0
    %760 = vmatprep.subr.mxu0 0.0
    %761 = vmatpush1.msra.mxu0 0.0
    %762 = vmatprep.subr.mxu0 0.0
    %763 = vmatpush1.msra.mxu0 0.0
    %764 = vmatprep.subr.mxu0 0.0
    %765 = vmatpush1.msra.mxu0 0.0
    %766 = vmatprep.subr.mxu0 0.0
    %767 = vmatpush1.msra.mxu0 0.0
    %768 = vmatprep.subr.mxu0 0.0
    %769 = vmatpush1.msra.mxu0 0.0
    %770 = vmatprep.subr.mxu0 0.0
    %771 = vmatpush1.msra.mxu0 0.0
    %772 = vmatprep.subr.mxu0 0.0
    %773 = vmatpush1.msra.mxu0 0.0
    %774 = vmatprep.subr.mxu0 0.0
    %775 = vmatpush1.msra.mxu0 0.0
    %776 = vmatprep.subr.mxu0 0.0
    %777 = vmatpush1.msra.mxu0 0.0
    %778 = vmatprep.subr.mxu0 0.0
    %779 = vmatpush1.msra.mxu0 %v749
    %780 = vmatprep.subr.mxu0 0.0
    %781 = vmatpush1.msra.mxu0 %v748
    %782 = vmatprep.subr.mxu0 0.0
    %783 = vmatpush2.msra.mxu0 0.0
    %784 = vmatprep.subr.mxu0 0.0
    %785 = vmatpush2.msra.mxu0 0.0
    %786 = vmatprep.subr.mxu0 0.0
    %787 = vmatpush2.msra.mxu0 0.0
    %788 = vmatprep.subr.mxu0 0.0
    %789 = vmatpush2.msra.mxu0 0.0
    %790 = vmatprep.subr.mxu0 0.0
    %791 = vmatpush2.msra.mxu0 0.0
    %792 = vmatprep.subr.mxu0 0.0
    %793 = vmatpush2.msra.mxu0 0.0
    %794 = vmatprep.subr.mxu0 0.0
    %795 = vmatpush2.msra.mxu0 0.0
    %796 = vmatprep.subr.mxu0 0.0
    %797 = vmatpush2.msra.mxu0 0.0
    %798 = vmatprep.subr.mxu0 0.0
    %799 = vmatpush2.msra.mxu0 0.0
    %800 = vmatprep.subr.mxu0 0.0
    %801 = vmatpush2.msra.mxu0 0.0
    %802 = vmatprep.subr.mxu0 0.0
    %803 = vmatpush2.msra.mxu0 0.0
    %804 = vmatprep.subr.mxu0 0.0
    %805 = vmatpush2.msra.mxu0 0.0
    %806 = vmatprep.subr.mxu0 0.0
    %807 = vmatpush2.msra.mxu0 0.0
    %808 = vmatprep.subr.mxu0 0.0
    %809 = vmatpush2.msra.mxu0 0.0
    %810 = vmatprep.subr.mxu0 0.0
    %811 = vmatpush2.msra.mxu0 0.0
    %812 = vmatprep.subr.mxu0 0.0
    %813 = vmatpush2.msra.mxu0 0.0
    %814 = vmatprep.mubr.f32.mxu0 0.0
    %815 = vmatmul.mubr.f32.gmra.mxu0 %v568
    %v816 = vpop.f32.mrf.mxu0
    %v817 = vadd.f32 0.0, %v816
    %v818 = vpop.f32.mrf.mxu0
    %819 = vmatprep.mubr.f32.mxu0 0.0
    %820 = vmatmul.mubr.f32.gmra.mxu0 %v571
    %v821 = vpop.f32.mrf.mxu0
    %v822 = vadd.f32 0.0, %v821
    %v823 = vpop.f32.mrf.mxu0
    %824 = vmatprep.mubr.f32.mxu0 0.0
    %825 = vmatmul.mubr.f32.gmra.mxu0 %v574
    %v826 = vpop.f32.mrf.mxu0
    %v827 = vadd.f32 0.0, %v826
    %v828 = vpop.f32.mrf.mxu0
    %829 = vdwg.mxu0
    %v830 = vmul.f32 %v817, %v68
    %v831 = vmul.f32 %v822, %v69
    %v832 = vmul.f32 %v827, %v70
    %v834 = vsel %vm112, %v830, 0
    %v837 = vsel %vm112, %v831, 0
    %v840 = vsel %vm112, %v832, 0
    %842 = vmatprep.subr.mxu0 0.0
    %843 = vmatpush1.msra.mxu0 0.0
    %844 = vmatprep.subr.mxu0 0.0
    %845 = vmatpush1.msra.mxu0 0.0
    %846 = vmatprep.subr.mxu0 0.0
    %847 = vmatpush1.msra.mxu0 0.0
    %848 = vmatprep.subr.mxu0 0.0
    %849 = vmatpush1.msra.mxu0 0.0
    %850 = vmatprep.subr.mxu0 0.0
    %851 = vmatpush1.msra.mxu0 0.0
    %852 = vmatprep.subr.mxu0 0.0
    %853 = vmatpush1.msra.mxu0 0.0
    %854 = vmatprep.subr.mxu0 0.0
    %855 = vmatpush1.msra.mxu0 0.0
    %856 = vmatprep.subr.mxu0 0.0
    %857 = vmatpush1.msra.mxu0 0.0
    %858 = vmatprep.subr.mxu0 0.0
    %859 = vmatpush1.msra.mxu0 0.0
    %860 = vmatprep.subr.mxu0 0.0
    %861 = vmatpush1.msra.mxu0 0.0
    %862 = vmatprep.subr.mxu0 0.0
    %863 = vmatpush1.msra.mxu0 0.0
    %864 = vmatprep.subr.mxu0 0.0
    %865 = vmatpush1.msra.mxu0 0.0
    %866 = vmatprep.subr.mxu0 0.0
    %867 = vmatpush1.msra.mxu0 0.0
    %868 = vmatprep.subr.mxu0 0.0
    %869 = vmatpush1.msra.mxu0 %v65
    %870 = vmatprep.subr.mxu0 0.0
    %871 = vmatpush1.msra.mxu0 %v64
    %872 = vmatprep.subr.mxu0 0.0
    %873 = vmatpush1.msra.mxu0 %v63
    %874 = vmatprep.subr.mxu0 0.0
    %875 = vmatpush2.msra.mxu0 0.0
    %876 = vmatprep.subr.mxu0 0.0
    %877 = vmatpush2.msra.mxu0 0.0
    %878 = vmatprep.subr.mxu0 0.0
    %879 = vmatpush2.msra.mxu0 0.0
    %880 = vmatprep.subr.mxu0 0.0
    %881 = vmatpush2.msra.mxu0 0.0
    %882 = vmatprep.subr.mxu0 0.0
    %883 = vmatpush2.msra.mxu0 0.0
    %884 = vmatprep.subr.mxu0 0.0
    %885 = vmatpush2.msra.mxu0 0.0
    %886 = vmatprep.subr.mxu0 0.0
    %887 = vmatpush2.msra.mxu0 0.0
    %888 = vmatprep.subr.mxu0 0.0
    %889 = vmatpush2.msra.mxu0 0.0
    %890 = vmatprep.subr.mxu0 0.0
    %891 = vmatpush2.msra.mxu0 0.0
    %892 = vmatprep.subr.mxu0 0.0
    %893 = vmatpush2.msra.mxu0 0.0
    %894 = vmatprep.subr.mxu0 0.0
    %895 = vmatpush2.msra.mxu0 0.0
    %896 = vmatprep.subr.mxu0 0.0
    %897 = vmatpush2.msra.mxu0 0.0
    %898 = vmatprep.subr.mxu0 0.0
    %899 = vmatpush2.msra.mxu0 0.0
    %900 = vmatprep.subr.mxu0 0.0
    %901 = vmatpush2.msra.mxu0 0.0
    %902 = vmatprep.subr.mxu0 0.0
    %903 = vmatpush2.msra.mxu0 0.0
    %904 = vmatprep.subr.mxu0 0.0
    %905 = vmatpush2.msra.mxu0 0.0
    %906 = vmatprep.mubr.f32.mxu0 0.0
    %907 = vmatmul.mubr.f32.gmra.mxu0 %v834
    %v908 = vpop.f32.mrf.mxu0
    %v909 = vadd.f32 0.0, %v908
    %v910 = vpop.f32.mrf.mxu0
    %911 = vmatprep.mubr.f32.mxu0 0.0
    %912 = vmatmul.mubr.f32.gmra.mxu0 %v837
    %v913 = vpop.f32.mrf.mxu0
    %v914 = vadd.f32 0.0, %v913
    %v915 = vpop.f32.mrf.mxu0
    %916 = vmatprep.mubr.f32.mxu0 0.0
    %917 = vmatmul.mubr.f32.gmra.mxu0 %v840
    %v918 = vpop.f32.mrf.mxu0
    %v919 = vadd.f32 0.0, %v918
    %v920 = vpop.f32.mrf.mxu0
    %921 = vdwg.mxu0
    %v922 = vlaneseq
    %v923 = vshrl.u32 %v922, 7
    %v924 = vsub.s32 3, %v923
    %v925 = vrot.slane %v76, %v924
    %v927 = vsel %vm90, %v735, 0
    %v930 = vsel %vm90, %v740, 0
    %v933 = vsel %vm90, %v745, 0
    %v936 = vsel %vm90, %v909, 0
    %v939 = vsel %vm90, %v914, 0
    %v942 = vsel %vm90, %v919, 0
    %vm944 = vcmask 1045504
    %v946 = vsel %vm944, %v79, 0
    %948 = vmatprep.subr.mxu0 0.0
    %949 = vmatpush1.msra.mxu0 0.0
    %950 = vmatprep.subr.mxu0 0.0
    %951 = vmatpush1.msra.mxu0 0.0
    %952 = vmatprep.subr.mxu0 0.0
    %953 = vmatpush1.msra.mxu0 0.0
    %954 = vmatprep.subr.mxu0 0.0
    %955 = vmatpush1.msra.mxu0 0.0
    %956 = vmatprep.subr.mxu0 0.0
    %957 = vmatpush1.msra.mxu0 0.0
    %958 = vmatprep.subr.mxu0 0.0
    %959 = vmatpush1.msra.mxu0 0.0
    %960 = vmatprep.subr.mxu0 0.0
    %961 = vmatpush1.msra.mxu0 0.0
    %962 = vmatprep.subr.mxu0 0.0
    %963 = vmatpush1.msra.mxu0 0.0
    %964 = vmatprep.subr.mxu0 0.0
    %965 = vmatpush1.msra.mxu0 0.0
    %966 = vmatprep.subr.mxu0 0.0
    %967 = vmatpush1.msra.mxu0 0.0
    %968 = vmatprep.subr.mxu0 0.0
    %969 = vmatpush1.msra.mxu0 0.0
    %970 = vmatprep.subr.mxu0 0.0
    %971 = vmatpush1.msra.mxu0 0.0
    %972 = vmatprep.subr.mxu0 0.0
    %973 = vmatpush1.msra.mxu0 0.0
    %974 = vmatprep.subr.mxu0 0.0
    %975 = vmatpush1.msra.mxu0 0.0
    %976 = vmatprep.subr.mxu0 0.0
    %977 = vmatpush1.msra.mxu0 0.0
    %978 = vmatprep.subr.mxu0 0.0
    %979 = vmatpush1.msra.mxu0 %v946
    %980 = vmatprep.subr.mxu0 0.0
    %981 = vmatpush2.msra.mxu0 0.0
    %982 = vmatprep.subr.mxu0 0.0
    %983 = vmatpush2.msra.mxu0 0.0
    %984 = vmatprep.subr.mxu0 0.0
    %985 = vmatpush2.msra.mxu0 0.0
    %986 = vmatprep.subr.mxu0 0.0
    %987 = vmatpush2.msra.mxu0 0.0
    %988 = vmatprep.subr.mxu0 0.0
    %989 = vmatpush2.msra.mxu0 0.0
    %990 = vmatprep.subr.mxu0 0.0
    %991 = vmatpush2.msra.mxu0 0.0
    %992 = vmatprep.subr.mxu0 0.0
    %993 = vmatpush2.msra.mxu0 0.0
    %994 = vmatprep.subr.mxu0 0.0
    %995 = vmatpush2.msra.mxu0 0.0
    %996 = vmatprep.subr.mxu0 0.0
    %997 = vmatpush2.msra.mxu0 0.0
    %998 = vmatprep.subr.mxu0 0.0
    %999 = vmatpush2.msra.mxu0 0.0
    %1000 = vmatprep.subr.mxu0 0.0
    %1001 = vmatpush2.msra.mxu0 0.0
    %1002 = vmatprep.subr.mxu0 0.0
    %1003 = vmatpush2.msra.mxu0 0.0
    %1004 = vmatprep.subr.mxu0 0.0
    %1005 = vmatpush2.msra.mxu0 0.0
    %1006 = vmatprep.subr.mxu0 0.0
    %1007 = vmatpush2.msra.mxu0 0.0
    %1008 = vmatprep.subr.mxu0 0.0
    %1009 = vmatpush2.msra.mxu0 0.0
    %1010 = vmatprep.subr.mxu0 0.0
    %1011 = vmatpush2.msra.mxu0 0.0
    %1012 = vmatprep.mubr.f32.mxu0 0.0
    %1013 = vmatmul.mubr.f32.gmra.mxu0 %v927
    %v1014 = vpop.f32.mrf.mxu0
    %v1015 = vadd.f32 %v925, %v1014
    %v1016 = vpop.f32.mrf.mxu0
    %1017 = vmatprep.mubr.f32.mxu0 0.0
    %1018 = vmatmul.mubr.f32.gmra.mxu0 %v930
    %v1019 = vpop.f32.mrf.mxu0
    %v1020 = vadd.f32 %v925, %v1019
    %v1021 = vpop.f32.mrf.mxu0
    %1022 = vmatprep.mubr.f32.mxu0 0.0
    %1023 = vmatmul.mubr.f32.gmra.mxu0 %v933
    %v1024 = vpop.f32.mrf.mxu0
    %v1025 = vadd.f32 %v925, %v1024
    %v1026 = vpop.f32.mrf.mxu0
    %1027 = vmatprep.mubr.f32.mxu0 0.0
    %1028 = vmatmul.mubr.f32.gmra.mxu0 %v936
    %v1029 = vpop.f32.mrf.mxu0
    %v1030 = vadd.f32 %v925, %v1029
    %v1031 = vpop.f32.mrf.mxu0
    %1032 = vmatprep.mubr.f32.mxu0 0.0
    %1033 = vmatmul.mubr.f32.gmra.mxu0 %v939
    %v1034 = vpop.f32.mrf.mxu0
    %v1035 = vadd.f32 %v925, %v1034
    %v1036 = vpop.f32.mrf.mxu0
    %1037 = vmatprep.mubr.f32.mxu0 0.0
    %1038 = vmatmul.mubr.f32.gmra.mxu0 %v942
    %v1039 = vpop.f32.mrf.mxu0
    %v1040 = vadd.f32 %v925, %v1039
    %v1041 = vpop.f32.mrf.mxu0
    %1042 = vdwg.mxu0
    %v1043 = vmax.f32 %v1015, 0.0
    %v1044 = vmax.f32 %v1020, 0.0
    %v1045 = vmax.f32 %v1025, 0.0
    %v1046 = vmax.f32 %v1030, 0.0
    %v1047 = vmax.f32 %v1035, 0.0
    %v1048 = vmax.f32 %v1040, 0.0
    %v1049 = vld [vmem:[%s8] sm:$0xff]
    %v1050 = vld [vmem:[%s8 + $0x8] sm:$0xff]
    %v1051 = vlaneseq
    %v1052 = vshrl.u32 %v1051, 7
    %v1053 = vsub.s32 4, %v1052
    %v1054 = vrot.slane %v76, %v1053
    %v1055 = vmul.f32 %v1043, %v1054
    %v1056 = vmul.f32 %v1044, %v1054
    %v1057 = vmul.f32 %v1045, %v1054
    %v1058 = vmul.f32 %v1046, %v1054
    %v1059 = vmul.f32 %v1047, %v1054
    %v1060 = vmul.f32 %v1048, %v1054
    %v1061 = vsel %vm196, %v1055, 0.0
    %1062 = vadd.xlane.f32.xlu0 %v1061
    %v1063 = vpop.xlane.xlu0 %1062
    %v1064 = vsel %vm196, %v1056, 0.0
    %1065 = vadd.xlane.f32.xlu0 %v1064
    %v1066 = vpop.xlane.xlu0 %1065
    %v1067 = vsel %vm196, %v1057, 0.0
    %1068 = vadd.xlane.f32.xlu0 %v1067
    %v1069 = vpop.xlane.xlu0 %1068
    %v1070 = vsel %vm196, %v1058, 0.0
    %1071 = vadd.xlane.f32.xlu0 %v1070
    %v1072 = vpop.xlane.xlu0 %1071
    %v1073 = vsel %vm196, %v1059, 0.0
    %1074 = vadd.xlane.f32.xlu0 %v1073
    %v1075 = vpop.xlane.xlu0 %1074
    %v1076 = vsel %vm196, %v1060, 0.0
    %1077 = vadd.xlane.f32.xlu0 %v1076
    %v1078 = vpop.xlane.xlu0 %1077
    %v1079 = vmul.f32 %v1063, %v73
    %v1080 = vmul.f32 %v1066, %v74
    %v1081 = vmul.f32 %v1069, %v75
    %1082 = vmatprep.subr.mxu0 0.0
    %1083 = vmatpush1.msra.mxu0 0.0
    %1084 = vmatprep.subr.mxu0 0.0
    %1085 = vmatpush1.msra.mxu0 0.0
    %1086 = vmatprep.subr.mxu0 0.0
    %1087 = vmatpush1.msra.mxu0 0.0
    %1088 = vmatprep.subr.mxu0 0.0
    %1089 = vmatpush1.msra.mxu0 0.0
    %1090 = vmatprep.subr.mxu0 0.0
    %1091 = vmatpush1.msra.mxu0 0.0
    %1092 = vmatprep.subr.mxu0 0.0
    %1093 = vmatpush1.msra.mxu0 0.0
    %1094 = vmatprep.subr.mxu0 0.0
    %1095 = vmatpush1.msra.mxu0 0.0
    %1096 = vmatprep.subr.mxu0 0.0
    %1097 = vmatpush1.msra.mxu0 0.0
    %1098 = vmatprep.subr.mxu0 0.0
    %1099 = vmatpush1.msra.mxu0 0.0
    %1100 = vmatprep.subr.mxu0 0.0
    %1101 = vmatpush1.msra.mxu0 0.0
    %1102 = vmatprep.subr.mxu0 0.0
    %1103 = vmatpush1.msra.mxu0 0.0
    %1104 = vmatprep.subr.mxu0 0.0
    %1105 = vmatpush1.msra.mxu0 0.0
    %1106 = vmatprep.subr.mxu0 0.0
    %1107 = vmatpush1.msra.mxu0 0.0
    %1108 = vmatprep.subr.mxu0 0.0
    %1109 = vmatpush1.msra.mxu0 %v1081
    %1110 = vmatprep.subr.mxu0 0.0
    %1111 = vmatpush1.msra.mxu0 %v1080
    %1112 = vmatprep.subr.mxu0 0.0
    %1113 = vmatpush1.msra.mxu0 %v1079
    %1114 = vmatprep.subr.mxu0 0.0
    %1115 = vmatpush2.msra.mxu0 0.0
    %1116 = vmatprep.subr.mxu0 0.0
    %1117 = vmatpush2.msra.mxu0 0.0
    %1118 = vmatprep.subr.mxu0 0.0
    %1119 = vmatpush2.msra.mxu0 0.0
    %1120 = vmatprep.subr.mxu0 0.0
    %1121 = vmatpush2.msra.mxu0 0.0
    %1122 = vmatprep.subr.mxu0 0.0
    %1123 = vmatpush2.msra.mxu0 0.0
    %1124 = vmatprep.subr.mxu0 0.0
    %1125 = vmatpush2.msra.mxu0 0.0
    %1126 = vmatprep.subr.mxu0 0.0
    %1127 = vmatpush2.msra.mxu0 0.0
    %1128 = vmatprep.subr.mxu0 0.0
    %1129 = vmatpush2.msra.mxu0 0.0
    %1130 = vmatprep.subr.mxu0 0.0
    %1131 = vmatpush2.msra.mxu0 0.0
    %1132 = vmatprep.subr.mxu0 0.0
    %1133 = vmatpush2.msra.mxu0 0.0
    %1134 = vmatprep.subr.mxu0 0.0
    %1135 = vmatpush2.msra.mxu0 0.0
    %1136 = vmatprep.subr.mxu0 0.0
    %1137 = vmatpush2.msra.mxu0 0.0
    %1138 = vmatprep.subr.mxu0 0.0
    %1139 = vmatpush2.msra.mxu0 0.0
    %1140 = vmatprep.subr.mxu0 0.0
    %1141 = vmatpush2.msra.mxu0 0.0
    %1142 = vmatprep.subr.mxu0 0.0
    %1143 = vmatpush2.msra.mxu0 0.0
    %1144 = vmatprep.subr.mxu0 0.0
    %1145 = vmatpush2.msra.mxu0 0.0
    %1146 = vmatprep.mubr.f32.mxu0 0.0
    %1147 = vmatmul.mubr.f32.gmra.mxu0 %v114
    %v1148 = vpop.f32.mrf.mxu0
    %v1149 = vadd.f32 0.0, %v1148
    %v1150 = vpop.f32.mrf.mxu0
    %1151 = vmatprep.mubr.f32.mxu0 0.0
    %1152 = vmatmul.mubr.f32.gmra.mxu0 %v117
    %v1153 = vpop.f32.mrf.mxu0
    %v1154 = vadd.f32 0.0, %v1153
    %v1155 = vpop.f32.mrf.mxu0
    %1156 = vdwg.mxu0
    %v1157 = vmul.f32 %v1149, %v66
    %v1158 = vmul.f32 %v1154, %v67
    %v1160 = vsel %vm196, %v1157, 0
    %v1163 = vsel %vm196, %v1158, 0
    %1165 = vmatprep.subr.mxu0 0.0
    %1166 = vmatpush1.msra.mxu0 0.0
    %1167 = vmatprep.subr.mxu0 0.0
    %1168 = vmatpush1.msra.mxu0 0.0
    %1169 = vmatprep.subr.mxu0 0.0
    %1170 = vmatpush1.msra.mxu0 0.0
    %1171 = vmatprep.subr.mxu0 0.0
    %1172 = vmatpush1.msra.mxu0 0.0
    %1173 = vmatprep.subr.mxu0 0.0
    %1174 = vmatpush1.msra.mxu0 0.0
    %1175 = vmatprep.subr.mxu0 0.0
    %1176 = vmatpush1.msra.mxu0 0.0
    %1177 = vmatprep.subr.mxu0 0.0
    %1178 = vmatpush1.msra.mxu0 0.0
    %1179 = vmatprep.subr.mxu0 0.0
    %1180 = vmatpush1.msra.mxu0 0.0
    %1181 = vmatprep.subr.mxu0 0.0
    %1182 = vmatpush1.msra.mxu0 0.0
    %1183 = vmatprep.subr.mxu0 0.0
    %1184 = vmatpush1.msra.mxu0 0.0
    %1185 = vmatprep.subr.mxu0 0.0
    %1186 = vmatpush1.msra.mxu0 0.0
    %1187 = vmatprep.subr.mxu0 0.0
    %1188 = vmatpush1.msra.mxu0 0.0
    %1189 = vmatprep.subr.mxu0 0.0
    %1190 = vmatpush1.msra.mxu0 0.0
    %1191 = vmatprep.subr.mxu0 0.0
    %1192 = vmatpush1.msra.mxu0 0.0
    %1193 = vmatprep.subr.mxu0 0.0
    %1194 = vmatpush1.msra.mxu0 %v542
    %1195 = vmatprep.subr.mxu0 0.0
    %1196 = vmatpush1.msra.mxu0 %v541
    %1197 = vmatprep.subr.mxu0 0.0
    %1198 = vmatpush2.msra.mxu0 0.0
    %1199 = vmatprep.subr.mxu0 0.0
    %1200 = vmatpush2.msra.mxu0 0.0
    %1201 = vmatprep.subr.mxu0 0.0
    %1202 = vmatpush2.msra.mxu0 0.0
    %1203 = vmatprep.subr.mxu0 0.0
    %1204 = vmatpush2.msra.mxu0 0.0
    %1205 = vmatprep.subr.mxu0 0.0
    %1206 = vmatpush2.msra.mxu0 0.0
    %1207 = vmatprep.subr.mxu0 0.0
    %1208 = vmatpush2.msra.mxu0 0.0
    %1209 = vmatprep.subr.mxu0 0.0
    %1210 = vmatpush2.msra.mxu0 0.0
    %1211 = vmatprep.subr.mxu0 0.0
    %1212 = vmatpush2.msra.mxu0 0.0
    %1213 = vmatprep.subr.mxu0 0.0
    %1214 = vmatpush2.msra.mxu0 0.0
    %1215 = vmatprep.subr.mxu0 0.0
    %1216 = vmatpush2.msra.mxu0 0.0
    %1217 = vmatprep.subr.mxu0 0.0
    %1218 = vmatpush2.msra.mxu0 0.0
    %1219 = vmatprep.subr.mxu0 0.0
    %1220 = vmatpush2.msra.mxu0 0.0
    %1221 = vmatprep.subr.mxu0 0.0
    %1222 = vmatpush2.msra.mxu0 0.0
    %1223 = vmatprep.subr.mxu0 0.0
    %1224 = vmatpush2.msra.mxu0 0.0
    %1225 = vmatprep.subr.mxu0 0.0
    %1226 = vmatpush2.msra.mxu0 0.0
    %1227 = vmatprep.subr.mxu0 0.0
    %1228 = vmatpush2.msra.mxu0 0.0
    %1229 = vmatprep.mubr.f32.mxu0 0.0
    %1230 = vmatmul.mubr.f32.gmra.mxu0 %v1160
    %v1231 = vpop.f32.mrf.mxu0
    %v1232 = vadd.f32 0.0, %v1231
    %v1233 = vpop.f32.mrf.mxu0
    %1234 = vmatprep.mubr.f32.mxu0 0.0
    %1235 = vmatmul.mubr.f32.gmra.mxu0 %v1163
    %v1236 = vpop.f32.mrf.mxu0
    %v1237 = vadd.f32 0.0, %v1236
    %v1238 = vpop.f32.mrf.mxu0
    %1239 = vdwg.mxu0
    %v1240 = vmul.f32 %v1072, %v73
    %v1241 = vmul.f32 %v1075, %v74
    %v1242 = vmul.f32 %v1078, %v75
    %1243 = vmatprep.subr.mxu0 0.0
    %1244 = vmatpush1.msra.mxu0 0.0
    %1245 = vmatprep.subr.mxu0 0.0
    %1246 = vmatpush1.msra.mxu0 0.0
    %1247 = vmatprep.subr.mxu0 0.0
    %1248 = vmatpush1.msra.mxu0 0.0
    %1249 = vmatprep.subr.mxu0 0.0
    %1250 = vmatpush1.msra.mxu0 0.0
    %1251 = vmatprep.subr.mxu0 0.0
    %1252 = vmatpush1.msra.mxu0 0.0
    %1253 = vmatprep.subr.mxu0 0.0
    %1254 = vmatpush1.msra.mxu0 0.0
    %1255 = vmatprep.subr.mxu0 0.0
    %1256 = vmatpush1.msra.mxu0 0.0
    %1257 = vmatprep.subr.mxu0 0.0
    %1258 = vmatpush1.msra.mxu0 0.0
    %1259 = vmatprep.subr.mxu0 0.0
    %1260 = vmatpush1.msra.mxu0 0.0
    %1261 = vmatprep.subr.mxu0 0.0
    %1262 = vmatpush1.msra.mxu0 0.0
    %1263 = vmatprep.subr.mxu0 0.0
    %1264 = vmatpush1.msra.mxu0 0.0
    %1265 = vmatprep.subr.mxu0 0.0
    %1266 = vmatpush1.msra.mxu0 0.0
    %1267 = vmatprep.subr.mxu0 0.0
    %1268 = vmatpush1.msra.mxu0 0.0
    %1269 = vmatprep.subr.mxu0 0.0
    %1270 = vmatpush1.msra.mxu0 %v1242
    %1271 = vmatprep.subr.mxu0 0.0
    %1272 = vmatpush1.msra.mxu0 %v1241
    %1273 = vmatprep.subr.mxu0 0.0
    %1274 = vmatpush1.msra.mxu0 %v1240
    %1275 = vmatprep.subr.mxu0 0.0
    %1276 = vmatpush2.msra.mxu0 0.0
    %1277 = vmatprep.subr.mxu0 0.0
    %1278 = vmatpush2.msra.mxu0 0.0
    %1279 = vmatprep.subr.mxu0 0.0
    %1280 = vmatpush2.msra.mxu0 0.0
    %1281 = vmatprep.subr.mxu0 0.0
    %1282 = vmatpush2.msra.mxu0 0.0
    %1283 = vmatprep.subr.mxu0 0.0
    %1284 = vmatpush2.msra.mxu0 0.0
    %1285 = vmatprep.subr.mxu0 0.0
    %1286 = vmatpush2.msra.mxu0 0.0
    %1287 = vmatprep.subr.mxu0 0.0
    %1288 = vmatpush2.msra.mxu0 0.0
    %1289 = vmatprep.subr.mxu0 0.0
    %1290 = vmatpush2.msra.mxu0 0.0
    %1291 = vmatprep.subr.mxu0 0.0
    %1292 = vmatpush2.msra.mxu0 0.0
    %1293 = vmatprep.subr.mxu0 0.0
    %1294 = vmatpush2.msra.mxu0 0.0
    %1295 = vmatprep.subr.mxu0 0.0
    %1296 = vmatpush2.msra.mxu0 0.0
    %1297 = vmatprep.subr.mxu0 0.0
    %1298 = vmatpush2.msra.mxu0 0.0
    %1299 = vmatprep.subr.mxu0 0.0
    %1300 = vmatpush2.msra.mxu0 0.0
    %1301 = vmatprep.subr.mxu0 0.0
    %1302 = vmatpush2.msra.mxu0 0.0
    %1303 = vmatprep.subr.mxu0 0.0
    %1304 = vmatpush2.msra.mxu0 0.0
    %1305 = vmatprep.subr.mxu0 0.0
    %1306 = vmatpush2.msra.mxu0 0.0
    %1307 = vmatprep.mubr.f32.mxu0 0.0
    %1308 = vmatmul.mubr.f32.gmra.mxu0 %v114
    %v1309 = vpop.f32.mrf.mxu0
    %v1310 = vadd.f32 0.0, %v1309
    %v1311 = vpop.f32.mrf.mxu0
    %1312 = vmatprep.mubr.f32.mxu0 0.0
    %1313 = vmatmul.mubr.f32.gmra.mxu0 %v117
    %v1314 = vpop.f32.mrf.mxu0
    %v1315 = vadd.f32 0.0, %v1314
    %v1316 = vpop.f32.mrf.mxu0
    %1317 = vdwg.mxu0
    %v1318 = vmul.f32 %v1310, %v66
    %v1319 = vmul.f32 %v1315, %v67
    %v1321 = vsel %vm196, %v1318, 0
    %v1324 = vsel %vm196, %v1319, 0
    %1326 = vmatprep.subr.mxu0 0.0
    %1327 = vmatpush1.msra.mxu0 0.0
    %1328 = vmatprep.subr.mxu0 0.0
    %1329 = vmatpush1.msra.mxu0 0.0
    %1330 = vmatprep.subr.mxu0 0.0
    %1331 = vmatpush1.msra.mxu0 0.0
    %1332 = vmatprep.subr.mxu0 0.0
    %1333 = vmatpush1.msra.mxu0 0.0
    %1334 = vmatprep.subr.mxu0 0.0
    %1335 = vmatpush1.msra.mxu0 0.0
    %1336 = vmatprep.subr.mxu0 0.0
    %1337 = vmatpush1.msra.mxu0 0.0
    %1338 = vmatprep.subr.mxu0 0.0
    %1339 = vmatpush1.msra.mxu0 0.0
    %1340 = vmatprep.subr.mxu0 0.0
    %1341 = vmatpush1.msra.mxu0 0.0
    %1342 = vmatprep.subr.mxu0 0.0
    %1343 = vmatpush1.msra.mxu0 0.0
    %1344 = vmatprep.subr.mxu0 0.0
    %1345 = vmatpush1.msra.mxu0 0.0
    %1346 = vmatprep.subr.mxu0 0.0
    %1347 = vmatpush1.msra.mxu0 0.0
    %1348 = vmatprep.subr.mxu0 0.0
    %1349 = vmatpush1.msra.mxu0 0.0
    %1350 = vmatprep.subr.mxu0 0.0
    %1351 = vmatpush1.msra.mxu0 0.0
    %1352 = vmatprep.subr.mxu0 0.0
    %1353 = vmatpush1.msra.mxu0 0.0
    %1354 = vmatprep.subr.mxu0 0.0
    %1355 = vmatpush1.msra.mxu0 %v544
    %1356 = vmatprep.subr.mxu0 0.0
    %1357 = vmatpush1.msra.mxu0 %v543
    %1358 = vmatprep.subr.mxu0 0.0
    %1359 = vmatpush2.msra.mxu0 0.0
    %1360 = vmatprep.subr.mxu0 0.0
    %1361 = vmatpush2.msra.mxu0 0.0
    %1362 = vmatprep.subr.mxu0 0.0
    %1363 = vmatpush2.msra.mxu0 0.0
    %1364 = vmatprep.subr.mxu0 0.0
    %1365 = vmatpush2.msra.mxu0 0.0
    %1366 = vmatprep.subr.mxu0 0.0
    %1367 = vmatpush2.msra.mxu0 0.0
    %1368 = vmatprep.subr.mxu0 0.0
    %1369 = vmatpush2.msra.mxu0 0.0
    %1370 = vmatprep.subr.mxu0 0.0
    %1371 = vmatpush2.msra.mxu0 0.0
    %1372 = vmatprep.subr.mxu0 0.0
    %1373 = vmatpush2.msra.mxu0 0.0
    %1374 = vmatprep.subr.mxu0 0.0
    %1375 = vmatpush2.msra.mxu0 0.0
    %1376 = vmatprep.subr.mxu0 0.0
    %1377 = vmatpush2.msra.mxu0 0.0
    %1378 = vmatprep.subr.mxu0 0.0
    %1379 = vmatpush2.msra.mxu0 0.0
    %1380 = vmatprep.subr.mxu0 0.0
    %1381 = vmatpush2.msra.mxu0 0.0
    %1382 = vmatprep.subr.mxu0 0.0
    %1383 = vmatpush2.msra.mxu0 0.0
    %1384 = vmatprep.subr.mxu0 0.0
    %1385 = vmatpush2.msra.mxu0 0.0
    %1386 = vmatprep.subr.mxu0 0.0
    %1387 = vmatpush2.msra.mxu0 0.0
    %1388 = vmatprep.subr.mxu0 0.0
    %1389 = vmatpush2.msra.mxu0 0.0
    %1390 = vmatprep.mubr.f32.mxu0 0.0
    %1391 = vmatmul.mubr.f32.gmra.mxu0 %v1321
    %v1392 = vpop.f32.mrf.mxu0
    %v1393 = vadd.f32 0.0, %v1392
    %v1394 = vpop.f32.mrf.mxu0
    %1395 = vmatprep.mubr.f32.mxu0 0.0
    %1396 = vmatmul.mubr.f32.gmra.mxu0 %v1324
    %v1397 = vpop.f32.mrf.mxu0
    %v1398 = vadd.f32 0.0, %v1397
    %v1399 = vpop.f32.mrf.mxu0
    %1400 = vdwg.mxu0
    %v1401 = vlaneseq
    %v1402 = vshrl.u32 %v1401, 7
    %v1403 = vsub.s32 5, %v1402
    %v1404 = vrot.slane %v76, %v1403
    %v1406 = vsel %vm196, %v1232, 0
    %v1409 = vsel %vm196, %v1237, 0
    %v1412 = vsel %vm196, %v1393, 0
    %v1415 = vsel %vm196, %v1398, 0
    %1417 = vmatprep.subr.mxu0 0.0
    %1418 = vmatpush1.msra.mxu0 0.0
    %1419 = vmatprep.subr.mxu0 0.0
    %1420 = vmatpush1.msra.mxu0 0.0
    %1421 = vmatprep.subr.mxu0 0.0
    %1422 = vmatpush1.msra.mxu0 0.0
    %1423 = vmatprep.subr.mxu0 0.0
    %1424 = vmatpush1.msra.mxu0 0.0
    %1425 = vmatprep.subr.mxu0 0.0
    %1426 = vmatpush1.msra.mxu0 0.0
    %1427 = vmatprep.subr.mxu0 0.0
    %1428 = vmatpush1.msra.mxu0 0.0
    %1429 = vmatprep.subr.mxu0 0.0
    %1430 = vmatpush1.msra.mxu0 0.0
    %1431 = vmatprep.subr.mxu0 0.0
    %1432 = vmatpush1.msra.mxu0 0.0
    %1433 = vmatprep.subr.mxu0 0.0
    %1434 = vmatpush1.msra.mxu0 0.0
    %1435 = vmatprep.subr.mxu0 0.0
    %1436 = vmatpush1.msra.mxu0 0.0
    %1437 = vmatprep.subr.mxu0 0.0
    %1438 = vmatpush1.msra.mxu0 0.0
    %1439 = vmatprep.subr.mxu0 0.0
    %1440 = vmatpush1.msra.mxu0 0.0
    %1441 = vmatprep.subr.mxu0 0.0
    %1442 = vmatpush1.msra.mxu0 0.0
    %1443 = vmatprep.subr.mxu0 0.0
    %1444 = vmatpush1.msra.mxu0 0.0
    %1445 = vmatprep.subr.mxu0 0.0
    %1446 = vmatpush1.msra.mxu0 %v1050
    %1447 = vmatprep.subr.mxu0 0.0
    %1448 = vmatpush1.msra.mxu0 %v1049
    %1449 = vmatprep.subr.mxu0 0.0
    %1450 = vmatpush2.msra.mxu0 0.0
    %1451 = vmatprep.subr.mxu0 0.0
    %1452 = vmatpush2.msra.mxu0 0.0
    %1453 = vmatprep.subr.mxu0 0.0
    %1454 = vmatpush2.msra.mxu0 0.0
    %1455 = vmatprep.subr.mxu0 0.0
    %1456 = vmatpush2.msra.mxu0 0.0
    %1457 = vmatprep.subr.mxu0 0.0
    %1458 = vmatpush2.msra.mxu0 0.0
    %1459 = vmatprep.subr.mxu0 0.0
    %1460 = vmatpush2.msra.mxu0 0.0
    %1461 = vmatprep.subr.mxu0 0.0
    %1462 = vmatpush2.msra.mxu0 0.0
    %1463 = vmatprep.subr.mxu0 0.0
    %1464 = vmatpush2.msra.mxu0 0.0
    %1465 = vmatprep.subr.mxu0 0.0
    %1466 = vmatpush2.msra.mxu0 0.0
    %1467 = vmatprep.subr.mxu0 0.0
    %1468 = vmatpush2.msra.mxu0 0.0
    %1469 = vmatprep.subr.mxu0 0.0
    %1470 = vmatpush2.msra.mxu0 0.0
    %1471 = vmatprep.subr.mxu0 0.0
    %1472 = vmatpush2.msra.mxu0 0.0
    %1473 = vmatprep.subr.mxu0 0.0
    %1474 = vmatpush2.msra.mxu0 0.0
    %1475 = vmatprep.subr.mxu0 0.0
    %1476 = vmatpush2.msra.mxu0 0.0
    %1477 = vmatprep.subr.mxu0 0.0
    %1478 = vmatpush2.msra.mxu0 0.0
    %1479 = vmatprep.subr.mxu0 0.0
    %1480 = vmatpush2.msra.mxu0 0.0
    %1481 = vmatprep.mubr.f32.mxu0 0.0
    %1482 = vmatmul.mubr.f32.gmra.mxu0 %v1406
    %v1483 = vpop.f32.mrf.mxu0
    %v1484 = vadd.f32 %v1404, %v1483
    %v1485 = vpop.f32.mrf.mxu0
    %1486 = vmatprep.mubr.f32.mxu0 0.0
    %1487 = vmatmul.mubr.f32.gmra.mxu0 %v1409
    %v1488 = vpop.f32.mrf.mxu0
    %v1489 = vadd.f32 %v1404, %v1488
    %v1490 = vpop.f32.mrf.mxu0
    %1491 = vmatprep.mubr.f32.mxu0 0.0
    %1492 = vmatmul.mubr.f32.gmra.mxu0 %v1412
    %v1493 = vpop.f32.mrf.mxu0
    %v1494 = vadd.f32 %v1404, %v1493
    %v1495 = vpop.f32.mrf.mxu0
    %1496 = vmatprep.mubr.f32.mxu0 0.0
    %1497 = vmatmul.mubr.f32.gmra.mxu0 %v1415
    %v1498 = vpop.f32.mrf.mxu0
    %v1499 = vadd.f32 %v1404, %v1498
    %v1500 = vpop.f32.mrf.mxu0
    %1501 = vdwg.mxu0
    %v1502 = vmax.f32 %v1484, 0.0
    %v1503 = vmax.f32 %v1489, 0.0
    %v1504 = vmax.f32 %v1494, 0.0
    %v1505 = vmax.f32 %v1499, 0.0
    %v1506 = vld [vmem:[%s10] sm:$0xff]
    %v1507 = vld [vmem:[%s10 + $0x8] sm:$0xff]
    %v1508 = vlaneseq
    %v1509 = vshrl.u32 %v1508, 7
    %v1510 = vsub.s32 0, %v1509
    %v1511 = vrot.slane %v77, %v1510
    %v1513 = vsel %vm196, %v1502, 0
    %v1516 = vsel %vm196, %v1503, 0
    %v1519 = vsel %vm196, %v1504, 0
    %v1522 = vsel %vm196, %v1505, 0
    %1524 = vmatprep.subr.mxu0 0.0
    %1525 = vmatpush1.msra.mxu0 0.0
    %1526 = vmatprep.subr.mxu0 0.0
    %1527 = vmatpush1.msra.mxu0 0.0
    %1528 = vmatprep.subr.mxu0 0.0
    %1529 = vmatpush1.msra.mxu0 0.0
    %1530 = vmatprep.subr.mxu0 0.0
    %1531 = vmatpush1.msra.mxu0 0.0
    %1532 = vmatprep.subr.mxu0 0.0
    %1533 = vmatpush1.msra.mxu0 0.0
    %1534 = vmatprep.subr.mxu0 0.0
    %1535 = vmatpush1.msra.mxu0 0.0
    %1536 = vmatprep.subr.mxu0 0.0
    %1537 = vmatpush1.msra.mxu0 0.0
    %1538 = vmatprep.subr.mxu0 0.0
    %1539 = vmatpush1.msra.mxu0 0.0
    %1540 = vmatprep.subr.mxu0 0.0
    %1541 = vmatpush1.msra.mxu0 0.0
    %1542 = vmatprep.subr.mxu0 0.0
    %1543 = vmatpush1.msra.mxu0 0.0
    %1544 = vmatprep.subr.mxu0 0.0
    %1545 = vmatpush1.msra.mxu0 0.0
    %1546 = vmatprep.subr.mxu0 0.0
    %1547 = vmatpush1.msra.mxu0 0.0
    %1548 = vmatprep.subr.mxu0 0.0
    %1549 = vmatpush1.msra.mxu0 0.0
    %1550 = vmatprep.subr.mxu0 0.0
    %1551 = vmatpush1.msra.mxu0 0.0
    %1552 = vmatprep.subr.mxu0 0.0
    %1553 = vmatpush1.msra.mxu0 %v1507
    %1554 = vmatprep.subr.mxu0 0.0
    %1555 = vmatpush1.msra.mxu0 %v1506
    %1556 = vmatprep.subr.mxu0 0.0
    %1557 = vmatpush2.msra.mxu0 0.0
    %1558 = vmatprep.subr.mxu0 0.0
    %1559 = vmatpush2.msra.mxu0 0.0
    %1560 = vmatprep.subr.mxu0 0.0
    %1561 = vmatpush2.msra.mxu0 0.0
    %1562 = vmatprep.subr.mxu0 0.0
    %1563 = vmatpush2.msra.mxu0 0.0
    %1564 = vmatprep.subr.mxu0 0.0
    %1565 = vmatpush2.msra.mxu0 0.0
    %1566 = vmatprep.subr.mxu0 0.0
    %1567 = vmatpush2.msra.mxu0 0.0
    %1568 = vmatprep.subr.mxu0 0.0
    %1569 = vmatpush2.msra.mxu0 0.0
    %1570 = vmatprep.subr.mxu0 0.0
    %1571 = vmatpush2.msra.mxu0 0.0
    %1572 = vmatprep.subr.mxu0 0.0
    %1573 = vmatpush2.msra.mxu0 0.0
    %1574 = vmatprep.subr.mxu0 0.0
    %1575 = vmatpush2.msra.mxu0 0.0
    %1576 = vmatprep.subr.mxu0 0.0
    %1577 = vmatpush2.msra.mxu0 0.0
    %1578 = vmatprep.subr.mxu0 0.0
    %1579 = vmatpush2.msra.mxu0 0.0
    %1580 = vmatprep.subr.mxu0 0.0
    %1581 = vmatpush2.msra.mxu0 0.0
    %1582 = vmatprep.subr.mxu0 0.0
    %1583 = vmatpush2.msra.mxu0 0.0
    %1584 = vmatprep.subr.mxu0 0.0
    %1585 = vmatpush2.msra.mxu0 0.0
    %1586 = vmatprep.subr.mxu0 0.0
    %1587 = vmatpush2.msra.mxu0 0.0
    %1588 = vmatprep.mubr.f32.mxu0 0.0
    %1589 = vmatmul.mubr.f32.gmra.mxu0 %v1513
    %v1590 = vpop.f32.mrf.mxu0
    %v1591 = vadd.f32 %v1511, %v1590
    %v1592 = vpop.f32.mrf.mxu0
    %1593 = vmatprep.mubr.f32.mxu0 0.0
    %1594 = vmatmul.mubr.f32.gmra.mxu0 %v1516
    %v1595 = vpop.f32.mrf.mxu0
    %v1596 = vadd.f32 %v1511, %v1595
    %v1597 = vpop.f32.mrf.mxu0
    %1598 = vmatprep.mubr.f32.mxu0 0.0
    %1599 = vmatmul.mubr.f32.gmra.mxu0 %v1519
    %v1600 = vpop.f32.mrf.mxu0
    %v1601 = vadd.f32 %v1511, %v1600
    %v1602 = vpop.f32.mrf.mxu0
    %1603 = vmatprep.mubr.f32.mxu0 0.0
    %1604 = vmatmul.mubr.f32.gmra.mxu0 %v1522
    %v1605 = vpop.f32.mrf.mxu0
    %v1606 = vadd.f32 %v1511, %v1605
    %v1607 = vpop.f32.mrf.mxu0
    %1608 = vdwg.mxu0
    %v1609 = vmax.f32 %v1591, 0.0
    %v1610 = vmax.f32 %v1596, 0.0
    %v1611 = vmax.f32 %v1601, 0.0
    %v1612 = vmax.f32 %v1606, 0.0
    %v1613 = vld [vmem:[%s12] sm:$0x3]
    %vm1614 = vcmask 261120
    %v1616 = vsel %vm1614, %v1613, 0
    %1618 = vmatprep.subr.mxu0 0.0
    %1619 = vmatpush1.msra.mxu0 0.0
    %1620 = vmatprep.subr.mxu0 0.0
    %1621 = vmatpush1.msra.mxu0 0.0
    %1622 = vmatprep.subr.mxu0 0.0
    %1623 = vmatpush1.msra.mxu0 0.0
    %1624 = vmatprep.subr.mxu0 0.0
    %1625 = vmatpush1.msra.mxu0 0.0
    %1626 = vmatprep.subr.mxu0 0.0
    %1627 = vmatpush1.msra.mxu0 0.0
    %1628 = vmatprep.subr.mxu0 0.0
    %1629 = vmatpush1.msra.mxu0 0.0
    %1630 = vmatprep.subr.mxu0 0.0
    %1631 = vmatpush1.msra.mxu0 0.0
    %1632 = vmatprep.subr.mxu0 0.0
    %1633 = vmatpush1.msra.mxu0 0.0
    %1634 = vmatprep.subr.mxu0 0.0
    %1635 = vmatpush1.msra.mxu0 0.0
    %1636 = vmatprep.subr.mxu0 0.0
    %1637 = vmatpush1.msra.mxu0 0.0
    %1638 = vmatprep.subr.mxu0 0.0
    %1639 = vmatpush1.msra.mxu0 0.0
    %1640 = vmatprep.subr.mxu0 0.0
    %1641 = vmatpush1.msra.mxu0 0.0
    %1642 = vmatprep.subr.mxu0 0.0
    %1643 = vmatpush1.msra.mxu0 %v1612
    %1644 = vmatprep.subr.mxu0 0.0
    %1645 = vmatpush1.msra.mxu0 %v1611
    %1646 = vmatprep.subr.mxu0 0.0
    %1647 = vmatpush1.msra.mxu0 %v1610
    %1648 = vmatprep.subr.mxu0 0.0
    %1649 = vmatpush1.msra.mxu0 %v1609
    %1650 = vmatprep.subr.mxu0 0.0
    %1651 = vmatpush2.msra.mxu0 0.0
    %1652 = vmatprep.subr.mxu0 0.0
    %1653 = vmatpush2.msra.mxu0 0.0
    %1654 = vmatprep.subr.mxu0 0.0
    %1655 = vmatpush2.msra.mxu0 0.0
    %1656 = vmatprep.subr.mxu0 0.0
    %1657 = vmatpush2.msra.mxu0 0.0
    %1658 = vmatprep.subr.mxu0 0.0
    %1659 = vmatpush2.msra.mxu0 0.0
    %1660 = vmatprep.subr.mxu0 0.0
    %1661 = vmatpush2.msra.mxu0 0.0
    %1662 = vmatprep.subr.mxu0 0.0
    %1663 = vmatpush2.msra.mxu0 0.0
    %1664 = vmatprep.subr.mxu0 0.0
    %1665 = vmatpush2.msra.mxu0 0.0
    %1666 = vmatprep.subr.mxu0 0.0
    %1667 = vmatpush2.msra.mxu0 0.0
    %1668 = vmatprep.subr.mxu0 0.0
    %1669 = vmatpush2.msra.mxu0 0.0
    %1670 = vmatprep.subr.mxu0 0.0
    %1671 = vmatpush2.msra.mxu0 0.0
    %1672 = vmatprep.subr.mxu0 0.0
    %1673 = vmatpush2.msra.mxu0 0.0
    %1674 = vmatprep.subr.mxu0 0.0
    %1675 = vmatpush2.msra.mxu0 0.0
    %1676 = vmatprep.subr.mxu0 0.0
    %1677 = vmatpush2.msra.mxu0 0.0
    %1678 = vmatprep.subr.mxu0 0.0
    %1679 = vmatpush2.msra.mxu0 0.0
    %1680 = vmatprep.subr.mxu0 0.0
    %1681 = vmatpush2.msra.mxu0 0.0
    %1682 = vmatprep.mubr.f32.mxu0 0.0
    %1683 = vmatmul.mubr.f32.gmra.mxu0 %v1616
    %v1684 = vpop.f32.mrf.mxu0
    %v1685 = vadd.f32 0.0, %v1684
    %v1686 = vpop.f32.mrf.mxu0
    %1687 = vdwg.mxu0
    %v1688 = vlaneseq
    %v1689 = vshrl.u32 %v1688, 7
    %v1690 = vsub.s32 1, %v1689
    %v1691 = vrot.slane %v77, %v1690
    %v1692 = vmul.f32 %v1685, %v1691
    %vm1693 = vcmask 123904
    %v1694 = vsel %vm1693, %v1692, 0.0
    %1695 = vadd.xlane.f32.xlu0 %v1694
    %v1696 = vpop.xlane.xlu0 %1695
    %v1697 = vlaneseq
    %v1698 = vshrl.u32 %v1697, 7
    %v1699 = vsub.s32 2, %v1698
    %v1700 = vrot.slane %v77, %v1699
    %v1701 = vadd.f32 %v1696, %v1700
    %vm1702 = vcmask 1024
    %1703 = vst.msk [vmem:[%s13] sm:$0x3] %vm1702, %v1701
    // Predicated region
    $region58: #{tpu_custom_call.1} parent=1 // pred_check
      _
    $region59: #{tpu_custom_call.1} parent=1 // pred_check_branch
      %1705 = sbr.rel (0) target = $region61
    $region60: #{tpu_custom_call.1} parent=1 // pred_region
      _
    $region61: #{tpu_custom_call.1} parent=1 // pred_fallthru
      _
    // Predicated region
    $region62: #{tpu_custom_call.1} parent=1 // pred_check
      _
    $region63: #{tpu_custom_call.1} parent=1 // pred_check_branch
      %1707 = sbr.rel (0) target = $region65
    $region64: #{tpu_custom_call.1} parent=1 // pred_region
      _
    $region65: #{tpu_custom_call.1} parent=1 // pred_fallthru
      _
    %1708 = vsyncpa [#allocation3], 1

</llo_original>
